<compile_context>
chip_gen: v5e
topology: v5e:2x2
jax: 0.10.0
libtpu: 0.0.40
codegen_flags: <defaults>
</compile_context>

<pallas_src>
import numpy as np
import jax
import jax.numpy as jnp
from jax.experimental import pallas as pl
from jax.experimental.pallas import tpu as pltpu


def _round_up(x, m):
    return ((x + m - 1) // m) * m


# ----------------------------------------------------------------------------
# Pallas kernels
# ----------------------------------------------------------------------------
def _slstm_seq_kernel(skip_ref,                        # SMEM (N,) int32 (scalar prefetch)
                      x_ref, h0_ref, c0_ref,           # inputs
                      m1_ref, m2_ref,
                      w_ref, b_ref, w2_ref, b2_ref,
                      hseq_ref, cT_ref,                # outputs
                      h_sc, c_sc, ring_sc):            # VMEM scratch
    """Full-sequence sLSTM layer for all ensemble members.

    grid = (N_members, seq_len).  Per timestep:
        gates = [x, h] @ [W_ih; W_hh] + b          (gate order i,f,g,o; one MXU push)
        c'    = sigmoid(f)*c + sigmoid(i)*tanh(g)
        h1    = sigmoid(o)*tanh(c')
        h2    = sigmoid(h_skip @ W2 + b2)          (h_skip = h entering step t-K, else 0)
        h'    = h1*mask1 + h2*mask2
    """
    n = pl.program_id(0)
    t = pl.program_id(1)
    Hp = h_sc.shape[-1]
    ring = ring_sc.shape[0]
    k_skip = skip_ref[n]

    @pl.when(t == 0)
    def _():
        h_sc[...] = h0_ref[0]
        c_sc[...] = c0_ref[0]
        ring_sc[...] = jnp.zeros_like(ring_sc)

    h = h_sc[...]
    c = c_sc[...]
    x = x_ref[0, 0]

    # Skip-hidden ring buffer: slot (t - K) mod ring holds h_in(t-K); slots that have
    # not been written yet this member are still zero (zeroed at t == 0), which exactly
    # reproduces the "buffer not full yet -> zeros" behaviour of the PyTorch module.
    read_slot = jax.lax.rem(t - k_skip + ring, ring)
    h_skip = ring_sc[read_slot]
    ring_sc[jax.lax.rem(t, ring)] = h          # store the incoming h AFTER the read

    xh = jnp.concatenate([x, h], axis=-1)                        # (Bp, Fp + Hp)
    gates = (jnp.dot(xh, w_ref[0], preferred_element_type=jnp.float32) + b_ref[0])

    i_g = jax.nn.sigmoid(gates[:, 0 * Hp:1 * Hp])
    f_g = jax.nn.sigmoid(gates[:, 1 * Hp:2 * Hp])
    g_g = jnp.tanh(gates[:, 2 * Hp:3 * Hp])
    o_g = jax.nn.sigmoid(gates[:, 3 * Hp:4 * Hp])

    new_c = f_g * c + i_g * g_g
    new_h1 = o_g * jnp.tanh(new_c)
    new_h2 = jax.nn.sigmoid(
        jnp.dot(h_skip, w2_ref[0], preferred_element_type=jnp.float32) + b2_ref[0])
    new_h = new_h1 * m1_ref[0, 0] + new_h2 * m2_ref[0, 0]

    h_sc[...] = new_h
    c_sc[...] = new_c
    hseq_ref[0, 0] = new_h
    cT_ref[0] = new_c


def _proj_kernel(h_ref, w_ref, b_ref, o_ref):
    o_ref[0, 0] = (jnp.dot(h_ref[0, 0], w_ref[0], preferred_element_type=jnp.float32)
                   + b_ref[0])


# ----------------------------------------------------------------------------
# pallas_call wrappers
# ----------------------------------------------------------------------------
def run_slstm_layer(x, h0, c0, m1, m2, W, Bb, W2, B2, skips, ring):
    """x: (N,T,Bp,Fp), h0/c0: (N,Bp,Hp), masks: (N,T,1,Hp), fused weights per member."""
    N, T, Bp, Fp = x.shape
    Hp = h0.shape[-1]
    grid_spec = pltpu.PrefetchScalarGridSpec(
        num_scalar_prefetch=1,
        grid=(N, T),
        in_specs=[
            pl.BlockSpec((1, 1, Bp, Fp),       lambda n, t, sk: (n, t, 0, 0)),
            pl.BlockSpec((1, Bp, Hp),          lambda n, t, sk: (n, 0, 0)),
            pl.BlockSpec((1, Bp, Hp),          lambda n, t, sk: (n, 0, 0)),
            pl.BlockSpec((1, 1, 1, Hp),        lambda n, t, sk: (n, t, 0, 0)),
            pl.BlockSpec((1, 1, 1, Hp),        lambda n, t, sk: (n, t, 0, 0)),
            pl.BlockSpec((1, Fp + Hp, 4 * Hp), lambda n, t, sk: (n, 0, 0)),
            pl.BlockSpec((1, 1, 4 * Hp),       lambda n, t, sk: (n, 0, 0)),
            pl.BlockSpec((1, Hp, Hp),          lambda n, t, sk: (n, 0, 0)),
            pl.BlockSpec((1, 1, Hp),           lambda n, t, sk: (n, 0, 0)),
        ],
        out_specs=[
            pl.BlockSpec((1, 1, Bp, Hp),       lambda n, t, sk: (n, t, 0, 0)),
            pl.BlockSpec((1, Bp, Hp),          lambda n, t, sk: (n, 0, 0)),
        ],
        scratch_shapes=[
            pltpu.VMEM((Bp, Hp), jnp.float32),          # h state
            pltpu.VMEM((Bp, Hp), jnp.float32),          # c state
            pltpu.VMEM((ring, Bp, Hp), jnp.float32),    # skip-hidden ring buffer
        ],
    )
    return pl.pallas_call(
        _slstm_seq_kernel,
        grid_spec=grid_spec,
        out_shape=(jax.ShapeDtypeStruct((N, T, Bp, Hp), jnp.float32),
                   jax.ShapeDtypeStruct((N, Bp, Hp), jnp.float32)),
        compiler_params=pltpu.CompilerParams(
            dimension_semantics=("parallel", "arbitrary")),
    )(skips, x, h0, c0, m1, m2, W, Bb, W2, B2)


def run_output_proj(hseq, out_w, out_b):
    """hseq: (N,T,Bp,Hp), out_w: (N,Hp,Op), out_b: (N,1,Op) -> (N,T,Bp,Op)."""
    N, T, Bp, Hp = hseq.shape
    Op = out_w.shape[-1]
    return pl.pallas_call(
        _proj_kernel,
        grid=(N, T),
        in_specs=[
            pl.BlockSpec((1, 1, Bp, Hp), lambda n, t: (n, t, 0, 0)),
            pl.BlockSpec((1, Hp, Op),    lambda n, t: (n, 0, 0)),
            pl.BlockSpec((1, 1, Op),     lambda n, t: (n, 0, 0)),
        ],
        out_specs=pl.BlockSpec((1, 1, Bp, Op), lambda n, t: (n, t, 0, 0)),
        out_shape=jax.ShapeDtypeStruct((N, T, Bp, Op), jnp.float32),
        compiler_params=pltpu.CompilerParams(
            dimension_semantics=("parallel", "parallel")),
    )(hseq, out_w, out_b)


# ----------------------------------------------------------------------------
# Parameter construction (shapes follow the PyTorch module)
# ----------------------------------------------------------------------------
def init_cell_params(key, input_size, hidden_size):
    k = jax.random.split(key, 5)
    bound = 1.0 / np.sqrt(hidden_size)
    w_ih = jax.random.uniform(k[0], (input_size, 4 * hidden_size), jnp.float32, -bound, bound)
    w_hh = jax.random.uniform(k[1], (hidden_size, 4 * hidden_size), jnp.float32, -bound, bound)
    b_ih = jax.random.uniform(k[2], (4 * hidden_size,), jnp.float32, -bound, bound)
    b_hh = jax.random.uniform(k[3], (4 * hidden_size,), jnp.float32, -bound, bound)
    w2 = 0.1 * jax.random.truncated_normal(k[4], -2.0, 2.0,
                                           (hidden_size, hidden_size), jnp.float32)
    b2 = jnp.zeros((1, hidden_size), jnp.float32)
    return dict(w_ih=w_ih, w_hh=w_hh, b=(b_ih + b_hh).reshape(1, -1), w2=w2, b2=b2)


def build_ensemble(key, N, input_size, hidden_size, output_size,
                   num_layers, limit_skip_steps, base_seed):
    aes = []
    for idx in range(N):
        key, *ks = jax.random.split(key, 2 * num_layers + 3)
        enc_cells, dec_cells = [], []
        for i in range(num_layers):
            enc_cells.append(init_cell_params(ks[i],
                                              input_size if i == 0 else hidden_size,
                                              hidden_size))
            dec_cells.append(init_cell_params(ks[num_layers + i],
                                              output_size if i == 0 else hidden_size,
                                              hidden_size))
        bound = 1.0 / np.sqrt(hidden_size)
        kw, kb = jax.random.split(ks[-1])
        out_w = jax.random.uniform(kw, (hidden_size, output_size), jnp.float32, -bound, bound)
        out_b = jax.random.uniform(kb, (1, output_size), jnp.float32, -bound, bound)
        # TODO(synk): deterministic stand-in for `random.choice(range(1, limit_skip_steps+1))`
        skip_steps = (idx % limit_skip_steps) + 1
        aes.append(dict(enc=enc_cells, dec=dec_cells, out_w=out_w, out_b=out_b,
                        skip_steps=skip_steps, seed=base_seed + idx,
                        hidden_size=hidden_size))
    return aes


def pack_ensemble(ensemble, seq_len, input_size, output_size):
    """Stack + pad all member parameters into lane/sublane-dense arrays."""
    N = len(ensemble)
    H = ensemble[0]['hidden_size']
    L = len(ensemble[0]['enc'])
    Hp = _round_up(H, 128)
    Op = _round_up(output_size, 128)

    skips = np.array([ae['skip_steps'] for ae in ensemble], np.int32)
    ring = int(max(1, skips.max()))

    # Per-member mask streams (every cell of a member owns a RandomState with the same
    # seed, hence identical per-step masks — matches the PyTorch module).
    m1_np = np.zeros((N, seq_len, H), np.float32)
    m2_np = np.zeros((N, seq_len, H), np.float32)
    for n, ae in enumerate(ensemble):
        rng = np.random.RandomState(ae['seed'])
        for t in range(seq_len):
            mc = rng.randint(0, 3, size=H)
            m1_np[n, t] = ((mc == 0) | (mc == 2)).astype(np.float32)
            m2_np[n, t] = ((mc == 1) | (mc == 2)).astype(np.float32)
    m1_p = np.zeros((N, seq_len, 1, Hp), np.float32)
    m2_p = np.zeros((N, seq_len, 1, Hp), np.float32)
    m1_p[:, :, 0, :H] = m1_np
    m2_p[:, :, 0, :H] = m2_np

    def fuse_layer(which, layer_idx, Fin):
        Fp = _round_up(Fin, 128)
        W = np.zeros((N, Fp + Hp, 4 * Hp), np.float32)
        Bb = np.zeros((N, 1, 4 * Hp), np.float32)
        W2 = np.zeros((N, Hp, Hp), np.float32)
        B2 = np.zeros((N, 1, Hp), np.float32)
        for n, ae in enumerate(ensemble):
            p = ae[which][layer_idx]
            w_ih = np.asarray(p['w_ih']); w_hh = np.asarray(p['w_hh'])
            bb = np.asarray(p['b']); w2 = np.asarray(p['w2']); b2 = np.asarray(p['b2'])
            for g in range(4):
                W[n, :Fin, g * Hp:g * Hp + H] = w_ih[:, g * H:(g + 1) * H]
                W[n, Fp:Fp + H, g * Hp:g * Hp + H] = w_hh[:, g * H:(g + 1) * H]
                Bb[n, 0, g * Hp:g * Hp + H] = bb[0, g * H:(g + 1) * H]
            W2[n, :H, :H] = w2
            B2[n, 0, :H] = b2[0]
        return tuple(jnp.asarray(a) for a in (W, Bb, W2, B2))

    enc_layers = [fuse_layer('enc', l, input_size if l == 0 else H) for l in range(L)]
    dec_layers = [fuse_layer('dec', l, output_size if l == 0 else H) for l in range(L)]

    out_w = np.zeros((N, Hp, Op), np.float32)
    out_b = np.zeros((N, 1, Op), np.float32)
    for n, ae in enumerate(ensemble):
        out_w[n, :H, :output_size] = np.asarray(ae['out_w'])
        out_b[n, 0, :output_size] = np.asarray(ae['out_b'])[0]

    return dict(N=N, L=L, H=H, Hp=Hp, Op=Op,
                Fp_in=_round_up(input_size, 128), Fp_out=_round_up(output_size, 128),
                skips=jnp.asarray(skips), skips_np=skips, ring=ring,
                m1=jnp.asarray(m1_p), m2=jnp.asarray(m2_p),
                m1_np=m1_np, m2_np=m2_np,
                enc=enc_layers, dec=dec_layers,
                out_w=jnp.asarray(out_w), out_b=jnp.asarray(out_b),
                input_size=input_size, output_size=output_size)


# ----------------------------------------------------------------------------
# Full forward pass (Pallas path)
# ----------------------------------------------------------------------------
def slstm_autoencoder_forward(packed, inputs, targets):
    T, B, _ = inputs.shape
    N, L, Hp = packed['N'], packed['L'], packed['Hp']
    Bp = _round_up(B, 8)

    def pad_bcast(a, Fp):
        Tl, Bl, Fl = a.shape
        ap = jnp.zeros((Tl, Bp, Fp), jnp.float32).at[:, :Bl, :Fl].set(a)
        return jnp.broadcast_to(ap[None], (N, Tl, Bp, Fp))

    # ---- encoder ----
    x = pad_bcast(inputs, packed['Fp_in'])
    zeros_state = jnp.zeros((N, Bp, Hp), jnp.float32)
    enc_finals = []
    for l in range(L):
        W, Bb, W2, B2 = packed['enc'][l]
        hseq, cT = run_slstm_layer(x, zeros_state, zeros_state,
                                   packed['m1'], packed['m2'],
                                   W, Bb, W2, B2, packed['skips'], packed['ring'])
        enc_finals.append((hseq[:, -1], cT))
        x = hseq

    # ---- decoder ----
    x = pad_bcast(targets, packed['Fp_out'])
    for l in range(L):
        W, Bb, W2, B2 = packed['dec'][l]
        h0, c0 = enc_finals[l]
        hseq, _ = run_slstm_layer(x, h0, c0,
                                  packed['m1'], packed['m2'],
                                  W, Bb, W2, B2, packed['skips'], packed['ring'])
        x = hseq

    y = run_output_proj(x, packed['out_w'], packed['out_b'])     # (N, T, Bp, Op)
    y = y[:, :, :B, :packed['output_size']]
    return jnp.mean(y, axis=0)                                   # (T, B, output_size)


# ----------------------------------------------------------------------------
# Pure-JAX reference (unpadded, same masks / skip semantics) for cross-check
# ----------------------------------------------------------------------------
_HP = jax.lax.Precision.HIGHEST


def _ref_cell(x, h, c, h_skip, p, m1, m2):
    H = h.shape[-1]
    gates = (jnp.dot(x, p['w_ih'], precision=_HP)
             + jnp.dot(h, p['w_hh'], precision=_HP) + p['b'])
    i_g = jax.nn.sigmoid(gates[:, 0 * H:1 * H])
    f_g = jax.nn.sigmoid(gates[:, 1 * H:2 * H])
    g_g = jnp.tanh(gates[:, 2 * H:3 * H])
    o_g = jax.nn.sigmoid(gates[:, 3 * H:4 * H])
    new_c = f_g * c + i_g * g_g
    new_h1 = o_g * jnp.tanh(new_c)
    new_h2 = jax.nn.sigmoid(jnp.dot(h_skip, p['w2'], precision=_HP) + p['b2'])
    return new_h1 * m1 + new_h2 * m2, new_c


def reference_forward(ensemble, packed, inputs, targets):
    T, B, _ = inputs.shape
    outs = []
    for n, ae in enumerate(ensemble):
        H = ae['hidden_size']
        K = int(packed['skips_np'][n])
        m1, m2 = packed['m1_np'][n], packed['m2_np'][n]
        L = len(ae['enc'])

        def run_stream(cells, x_seq, states, project=None):
            buffers = [[] for _ in range(L)]
            states = list(states)
            ys = []
            for t in range(T):
                inp = x_seq[t]
                for i in range(L):
                    h, c = states[i]
                    buffers[i].append(h)
                    h_skip = buffers[i].pop(0) if len(buffers[i]) > K else jnp.zeros_like(h)
                    h, c = _ref_cell(inp, h, c, h_skip, cells[i], m1[t], m2[t])
                    states[i] = (h, c)
                    inp = h
                ys.append(project(inp) if project is not None else inp)
            return states, ys

        zero = [(jnp.zeros((B, H), jnp.float32), jnp.zeros((B, H), jnp.float32))
                for _ in range(L)]
        enc_states, _ = run_stream(ae['enc'], inputs, zero)
        _, ys = run_stream(ae['dec'], targets, enc_states,
                           project=lambda h: jnp.dot(h, ae['out_w'], precision=_HP) + ae['out_b'])
        outs.append(jnp.stack(ys, axis=0))
    return jnp.mean(jnp.stack(outs, axis=0), axis=0)


# ----------------------------------------------------------------------------
if __name__ == "__main__":
    # TODO(synk): file-based mask save/load (masked_weight(load=True) from .npy) has no
    # Pallas equivalent; masks are generated with identical RandomState semantics instead.
    N = 2
    num_layers = 1
    seq_len, batch = 8, 2
    input_size, hidden_size, output_size = 4, 32, 4
    limit_skip_steps = 2
    base_seed = 42

    key = jax.random.PRNGKey(0)
    k_in, k_tg, k_par = jax.random.split(key, 3)
    inputs = jax.random.normal(k_in, (seq_len, batch, input_size), jnp.float32)
    targets = jax.random.normal(k_tg, (seq_len, batch, output_size), jnp.float32)

    ensemble = build_ensemble(k_par, N, input_size, hidden_size, output_size,
                              num_layers, limit_skip_steps, base_seed)
    packed = pack_ensemble(ensemble, seq_len, input_size, output_size)

    out = slstm_autoencoder_forward(packed, inputs, targets)
    out = jax.block_until_ready(out)
    assert out.shape == (seq_len, batch, output_size)

    ref = reference_forward(ensemble, packed, inputs, targets)
    ref = jax.block_until_ready(ref)
    np.testing.assert_allclose(np.asarray(out), np.asarray(ref), atol=2e-2, rtol=2e-2)

    print("KERNEL_OK")
</pallas_src>

<mosaic_0001>
module attributes {stable_mosaic.version = 11 : i64} {
  func.func @_slstm_seq_kernel(%arg0: i32, %arg1: i32, %arg2: memref<2xi32, #tpu.memory_space<smem>>, %arg3: memref<1x1x8x128xf32, #tpu.memory_space<vmem>>, %arg4: memref<1x8x128xf32, #tpu.memory_space<vmem>>, %arg5: memref<1x8x128xf32, #tpu.memory_space<vmem>>, %arg6: memref<1x1x1x128xf32, #tpu.memory_space<vmem>>, %arg7: memref<1x1x1x128xf32, #tpu.memory_space<vmem>>, %arg8: memref<1x256x512xf32, #tpu.memory_space<vmem>>, %arg9: memref<1x1x512xf32, #tpu.memory_space<vmem>>, %arg10: memref<1x128x128xf32, #tpu.memory_space<vmem>>, %arg11: memref<1x1x128xf32, #tpu.memory_space<vmem>>, %arg12: memref<1x1x8x128xf32, #tpu.memory_space<vmem>>, %arg13: memref<1x8x128xf32, #tpu.memory_space<vmem>>, %arg14: memref<8x128xf32, #tpu.memory_space<vmem>>, %arg15: memref<8x128xf32, #tpu.memory_space<vmem>>, %arg16: memref<2x8x128xf32, #tpu.memory_space<vmem>>) attributes {dimension_semantics = [#tpu.dimension_semantics<parallel>, #tpu.dimension_semantics<arbitrary>], iteration_bounds = array<i64: 2, 8>, scalar_prefetch = 1 : i64, scratch_operands = 3 : i64, tpu.core_type = #tpu.core_type<tc>, window_params = [{transform_indices = @transform_0, window_bounds = array<i64: 1, 1, 8, 128>}, {transform_indices = @transform_1, window_bounds = array<i64: 1, 8, 128>}, {transform_indices = @transform_2, window_bounds = array<i64: 1, 8, 128>}, {transform_indices = @transform_3, window_bounds = array<i64: 1, 1, 1, 128>}, {transform_indices = @transform_4, window_bounds = array<i64: 1, 1, 1, 128>}, {transform_indices = @transform_5, window_bounds = array<i64: 1, 256, 512>}, {transform_indices = @transform_6, window_bounds = array<i64: 1, 1, 512>}, {transform_indices = @transform_7, window_bounds = array<i64: 1, 128, 128>}, {transform_indices = @transform_8, window_bounds = array<i64: 1, 1, 128>}, {transform_indices = @transform_9, window_bounds = array<i64: 1, 1, 8, 128>}, {transform_indices = @transform_10, window_bounds = array<i64: 1, 8, 128>}]} {
    %0 = arith.index_cast %arg0 : i32 to index
    %1 = memref.load %arg2[%0] : memref<2xi32, #tpu.memory_space<smem>>
    %c0_i32 = arith.constant 0 : i32
    %2 = arith.cmpi eq, %arg1, %c0_i32 : i32
    %3 = arith.extui %2 : i1 to i32
    %c0_i32_0 = arith.constant 0 : i32
    %4 = arith.cmpi ne, %3, %c0_i32_0 : i32
    scf.if %4 {
      %c0_50 = arith.constant 0 : index
      %c0_51 = arith.constant 0 : index
      %c0_52 = arith.constant 0 : index
      %82 = vector.load %arg4[%c0_50, %c0_51, %c0_52] : memref<1x8x128xf32, #tpu.memory_space<vmem>>, vector<1x8x128xf32>
      %83 = vector.shape_cast %82 : vector<1x8x128xf32> to vector<8x128xf32>
      %c0_53 = arith.constant 0 : index
      %c0_54 = arith.constant 0 : index
      %84 = vector.load %arg14[%c0_53, %c0_54] : memref<8x128xf32, #tpu.memory_space<vmem>>, vector<8x128xf32>
      tpu.vector_store %arg14[%c0_53, %c0_54], %83 {strides = array<i32>} : memref<8x128xf32, #tpu.memory_space<vmem>>, vector<8x128xf32>,
      %c0_55 = arith.constant 0 : index
      %c0_56 = arith.constant 0 : index
      %c0_57 = arith.constant 0 : index
      %85 = vector.load %arg5[%c0_55, %c0_56, %c0_57] : memref<1x8x128xf32, #tpu.memory_space<vmem>>, vector<1x8x128xf32>
      %86 = vector.shape_cast %85 : vector<1x8x128xf32> to vector<8x128xf32>
      %c0_58 = arith.constant 0 : index
      %c0_59 = arith.constant 0 : index
      %87 = vector.load %arg15[%c0_58, %c0_59] : memref<8x128xf32, #tpu.memory_space<vmem>>, vector<8x128xf32>
      tpu.vector_store %arg15[%c0_58, %c0_59], %86 {strides = array<i32>} : memref<8x128xf32, #tpu.memory_space<vmem>>, vector<8x128xf32>,
      %cst_60 = arith.constant 0.000000e+00 : f32
      %88 = vector.broadcast %cst_60 : f32 to vector<2x8x128xf32>
      %c0_61 = arith.constant 0 : index
      %c0_62 = arith.constant 0 : index
      %c0_63 = arith.constant 0 : index
      %89 = vector.load %arg16[%c0_61, %c0_62, %c0_63] : memref<2x8x128xf32, #tpu.memory_space<vmem>>, vector<2x8x128xf32>
      tpu.vector_store %arg16[%c0_61, %c0_62, %c0_63], %88 {strides = array<i32>} : memref<2x8x128xf32, #tpu.memory_space<vmem>>, vector<2x8x128xf32>,
    } else {
    }
    %c0 = arith.constant 0 : index
    %c0_1 = arith.constant 0 : index
    %5 = vector.load %arg14[%c0, %c0_1] : memref<8x128xf32, #tpu.memory_space<vmem>>, vector<8x128xf32>
    %c0_2 = arith.constant 0 : index
    %c0_3 = arith.constant 0 : index
    %6 = vector.load %arg15[%c0_2, %c0_3] : memref<8x128xf32, #tpu.memory_space<vmem>>, vector<8x128xf32>
    %c0_4 = arith.constant 0 : index
    %c0_5 = arith.constant 0 : index
    %c0_6 = arith.constant 0 : index
    %c0_7 = arith.constant 0 : index
    %7 = vector.load %arg3[%c0_4, %c0_5, %c0_6, %c0_7] : memref<1x1x8x128xf32, #tpu.memory_space<vmem>>, vector<1x1x8x128xf32>
    %8 = vector.shape_cast %7 : vector<1x1x8x128xf32> to vector<8x128xf32>
    %9 = arith.subi %arg1, %1 : i32
    %c2_i32 = arith.constant 2 : i32
    %10 = arith.addi %9, %c2_i32 : i32
    %c2_i32_8 = arith.constant 2 : i32
    %11 = arith.remsi %10, %c2_i32_8 : i32
    %12 = arith.index_cast %11 : i32 to index
    %c0_9 = arith.constant 0 : index
    %c0_10 = arith.constant 0 : index
    %13 = vector.load %arg16[%12, %c0_9, %c0_10] : memref<2x8x128xf32, #tpu.memory_space<vmem>>, vector<1x8x128xf32>
    %14 = vector.shape_cast %13 : vector<1x8x128xf32> to vector<8x128xf32>
    %c2_i32_11 = arith.constant 2 : i32
    %15 = arith.remsi %arg1, %c2_i32_11 : i32
    %16 = arith.index_cast %15 : i32 to index
    %c0_12 = arith.constant 0 : index
    %c0_13 = arith.constant 0 : index
    %17 = vector.load %arg16[%16, %c0_12, %c0_13] : memref<2x8x128xf32, #tpu.memory_space<vmem>>, vector<1x8x128xf32>
    %18 = vector.shape_cast %17 : vector<1x8x128xf32> to vector<8x128xf32>
    %19 = vector.shape_cast %5 : vector<8x128xf32> to vector<1x8x128xf32>
    tpu.vector_store %arg16[%16, %c0_12, %c0_13], %19 {strides = array<i32>} : memref<2x8x128xf32, #tpu.memory_space<vmem>>, vector<1x8x128xf32>,
    %20 = tpu.concatenate %8, %5 in 1 : vector<8x128xf32>, vector<8x128xf32> -> vector<8x256xf32>
    %c0_14 = arith.constant 0 : index
    %c0_15 = arith.constant 0 : index
    %c0_16 = arith.constant 0 : index
    %21 = vector.load %arg8[%c0_14, %c0_15, %c0_16] : memref<1x256x512xf32, #tpu.memory_space<vmem>>, vector<1x256x512xf32>
    %22 = vector.shape_cast %21 : vector<1x256x512xf32> to vector<256x512xf32>
    %cst = arith.constant dense<0.000000e+00> : vector<8x512xf32>
    %23 = tpu.matmul %20, %22, %cst {dimension_numbers = #tpu.dot_dimension_numbers<[1], [0], [0], [1], [0, 0, 1, 1], [], []>} : vector<8x256xf32>, vector<256x512xf32>, vector<8x512xf32> -> vector<8x512xf32>
    %c0_17 = arith.constant 0 : index
    %c0_18 = arith.constant 0 : index
    %c0_19 = arith.constant 0 : index
    %24 = vector.load %arg9[%c0_17, %c0_18, %c0_19] : memref<1x1x512xf32, #tpu.memory_space<vmem>>, vector<1x1x512xf32>
    %25 = vector.shape_cast %24 : vector<1x1x512xf32> to vector<1x512xf32>
    %26 = vector.broadcast %25 : vector<1x512xf32> to vector<8x512xf32>
    %27 = arith.addf %23, %26 : vector<8x512xf32>
    %28 = vector.extract_strided_slice %27 {offsets = [0, 0], sizes = [8, 128], strides = [1, 1]} : vector<8x512xf32> to vector<8x128xf32>
    %29 = arith.negf %28 : vector<8x128xf32>
    %30 = math.exp %29 : vector<8x128xf32>
    %cst_20 = arith.constant 1.000000e+00 : f32
    %31 = vector.broadcast %cst_20 : f32 to vector<8x128xf32>
    %32 = arith.addf %31, %30 : vector<8x128xf32>
    %33 = arith.divf %31, %32 : vector<8x128xf32>
    %34 = vector.extract_strided_slice %27 {offsets = [0, 128], sizes = [8, 128], strides = [1, 1]} : vector<8x512xf32> to vector<8x128xf32>
    %35 = arith.negf %34 : vector<8x128xf32>
    %36 = math.exp %35 : vector<8x128xf32>
    %cst_21 = arith.constant 1.000000e+00 : f32
    %37 = vector.broadcast %cst_21 : f32 to vector<8x128xf32>
    %38 = arith.addf %37, %36 : vector<8x128xf32>
    %39 = arith.divf %37, %38 : vector<8x128xf32>
    %40 = vector.extract_strided_slice %27 {offsets = [0, 256], sizes = [8, 128], strides = [1, 1]} : vector<8x512xf32> to vector<8x128xf32>
    %41 = math.tanh %40 : vector<8x128xf32>
    %42 = vector.extract_strided_slice %27 {offsets = [0, 384], sizes = [8, 128], strides = [1, 1]} : vector<8x512xf32> to vector<8x128xf32>
    %43 = arith.negf %42 : vector<8x128xf32>
    %44 = math.exp %43 : vector<8x128xf32>
    %cst_22 = arith.constant 1.000000e+00 : f32
    %45 = vector.broadcast %cst_22 : f32 to vector<8x128xf32>
    %46 = arith.addf %45, %44 : vector<8x128xf32>
    %47 = arith.divf %45, %46 : vector<8x128xf32>
    %48 = arith.mulf %39, %6 : vector<8x128xf32>
    %49 = arith.mulf %33, %41 : vector<8x128xf32>
    %50 = arith.addf %48, %49 : vector<8x128xf32>
    %51 = math.tanh %50 : vector<8x128xf32>
    %52 = arith.mulf %47, %51 : vector<8x128xf32>
    %c0_23 = arith.constant 0 : index
    %c0_24 = arith.constant 0 : index
    %c0_25 = arith.constant 0 : index
    %53 = vector.load %arg10[%c0_23, %c0_24, %c0_25] : memref<1x128x128xf32, #tpu.memory_space<vmem>>, vector<1x128x128xf32>
    %54 = vector.shape_cast %53 : vector<1x128x128xf32> to vector<128x128xf32>
    %cst_26 = arith.constant dense<0.000000e+00> : vector<8x128xf32>
    %55 = tpu.matmul %14, %54, %cst_26 {dimension_numbers = #tpu.dot_dimension_numbers<[1], [0], [0], [1], [0, 0, 1, 1], [], []>} : vector<8x128xf32>, vector<128x128xf32>, vector<8x128xf32> -> vector<8x128xf32>
    %c0_27 = arith.constant 0 : index
    %c0_28 = arith.constant 0 : index
    %c0_29 = arith.constant 0 : index
    %56 = vector.load %arg11[%c0_27, %c0_28, %c0_29] : memref<1x1x128xf32, #tpu.memory_space<vmem>>, vector<1x1x128xf32>
    %57 = vector.shape_cast %56 : vector<1x1x128xf32> to vector<1x128xf32>
    %58 = vector.broadcast %57 : vector<1x128xf32> to vector<8x128xf32>
    %59 = arith.addf %55, %58 : vector<8x128xf32>
    %60 = arith.negf %59 : vector<8x128xf32>
    %61 = math.exp %60 : vector<8x128xf32>
    %cst_30 = arith.constant 1.000000e+00 : f32
    %62 = vector.broadcast %cst_30 : f32 to vector<8x128xf32>
    %63 = arith.addf %62, %61 : vector<8x128xf32>
    %64 = arith.divf %62, %63 : vector<8x128xf32>
    %c0_31 = arith.constant 0 : index
    %c0_32 = arith.constant 0 : index
    %c0_33 = arith.constant 0 : index
    %c0_34 = arith.constant 0 : index
    %65 = vector.load %arg6[%c0_31, %c0_32, %c0_33, %c0_34] : memref<1x1x1x128xf32, #tpu.memory_space<vmem>>, vector<1x1x1x128xf32>
    %66 = vector.shape_cast %65 : vector<1x1x1x128xf32> to vector<1x128xf32>
    %67 = vector.broadcast %66 : vector<1x128xf32> to vector<8x128xf32>
    %68 = arith.mulf %52, %67 : vector<8x128xf32>
    %c0_35 = arith.constant 0 : index
    %c0_36 = arith.constant 0 : index
    %c0_37 = arith.constant 0 : index
    %c0_38 = arith.constant 0 : index
    %69 = vector.load %arg7[%c0_35, %c0_36, %c0_37, %c0_38] : memref<1x1x1x128xf32, #tpu.memory_space<vmem>>, vector<1x1x1x128xf32>
    %70 = vector.shape_cast %69 : vector<1x1x1x128xf32> to vector<1x128xf32>
    %71 = vector.broadcast %70 : vector<1x128xf32> to vector<8x128xf32>
    %72 = arith.mulf %64, %71 : vector<8x128xf32>
    %73 = arith.addf %68, %72 : vector<8x128xf32>
    %c0_39 = arith.constant 0 : index
    %c0_40 = arith.constant 0 : index
    %74 = vector.load %arg14[%c0_39, %c0_40] : memref<8x128xf32, #tpu.memory_space<vmem>>, vector<8x128xf32>
    tpu.vector_store %arg14[%c0_39, %c0_40], %73 {strides = array<i32>} : memref<8x128xf32, #tpu.memory_space<vmem>>, vector<8x128xf32>,
    %c0_41 = arith.constant 0 : index
    %c0_42 = arith.constant 0 : index
    %75 = vector.load %arg15[%c0_41, %c0_42] : memref<8x128xf32, #tpu.memory_space<vmem>>, vector<8x128xf32>
    tpu.vector_store %arg15[%c0_41, %c0_42], %50 {strides = array<i32>} : memref<8x128xf32, #tpu.memory_space<vmem>>, vector<8x128xf32>,
    %c0_43 = arith.constant 0 : index
    %c0_44 = arith.constant 0 : index
    %c0_45 = arith.constant 0 : index
    %c0_46 = arith.constant 0 : index
    %76 = vector.load %arg12[%c0_43, %c0_44, %c0_45, %c0_46] : memref<1x1x8x128xf32, #tpu.memory_space<vmem>>, vector<1x1x8x128xf32>
    %77 = vector.shape_cast %76 : vector<1x1x8x128xf32> to vector<8x128xf32>
    %78 = vector.shape_cast %73 : vector<8x128xf32> to vector<1x1x8x128xf32>
    tpu.vector_store %arg12[%c0_43, %c0_44, %c0_45, %c0_46], %78 {strides = array<i32>} : memref<1x1x8x128xf32, #tpu.memory_space<vmem>>, vector<1x1x8x128xf32>,
    %c0_47 = arith.constant 0 : index
    %c0_48 = arith.constant 0 : index
    %c0_49 = arith.constant 0 : index
    %79 = vector.load %arg13[%c0_47, %c0_48, %c0_49] : memref<1x8x128xf32, #tpu.memory_space<vmem>>, vector<1x8x128xf32>
    %80 = vector.shape_cast %79 : vector<1x8x128xf32> to vector<8x128xf32>
    %81 = vector.shape_cast %50 : vector<8x128xf32> to vector<1x8x128xf32>
    tpu.vector_store %arg13[%c0_47, %c0_48, %c0_49], %81 {strides = array<i32>} : memref<1x8x128xf32, #tpu.memory_space<vmem>>, vector<1x8x128xf32>,
    return
  }
  func.func @transform_0(%arg0: i32, %arg1: i32, %arg2: memref<2xi32, #tpu.memory_space<smem>>) -> (i32, i32, i32, i32) {
    %c0_i32 = arith.constant 0 : i32
    %c0_i32_0 = arith.constant 0 : i32
    %c0_i32_1 = arith.constant 0 : i32
    return %arg0, %arg1, %c0_i32, %c0_i32_0 : i32, i32, i32, i32
  }
  func.func @transform_1(%arg0: i32, %arg1: i32, %arg2: memref<2xi32, #tpu.memory_space<smem>>) -> (i32, i32, i32) {
    %c0_i32 = arith.constant 0 : i32
    %c0_i32_0 = arith.constant 0 : i32
    %c0_i32_1 = arith.constant 0 : i32
    return %arg0, %c0_i32, %c0_i32_0 : i32, i32, i32
  }
  func.func @transform_2(%arg0: i32, %arg1: i32, %arg2: memref<2xi32, #tpu.memory_space<smem>>) -> (i32, i32, i32) {
    %c0_i32 = arith.constant 0 : i32
    %c0_i32_0 = arith.constant 0 : i32
    %c0_i32_1 = arith.constant 0 : i32
    return %arg0, %c0_i32, %c0_i32_0 : i32, i32, i32
  }
  func.func @transform_3(%arg0: i32, %arg1: i32, %arg2: memref<2xi32, #tpu.memory_space<smem>>) -> (i32, i32, i32, i32) {
    %c0_i32 = arith.constant 0 : i32
    %c0_i32_0 = arith.constant 0 : i32
    %c0_i32_1 = arith.constant 0 : i32
    return %arg0, %arg1, %c0_i32, %c0_i32_0 : i32, i32, i32, i32
  }
  func.func @transform_4(%arg0: i32, %arg1: i32, %arg2: memref<2xi32, #tpu.memory_space<smem>>) -> (i32, i32, i32, i32) {
    %c0_i32 = arith.constant 0 : i32
    %c0_i32_0 = arith.constant 0 : i32
    %c0_i32_1 = arith.constant 0 : i32
    return %arg0, %arg1, %c0_i32, %c0_i32_0 : i32, i32, i32, i32
  }
  func.func @transform_5(%arg0: i32, %arg1: i32, %arg2: memref<2xi32, #tpu.memory_space<smem>>) -> (i32, i32, i32) {
    %c0_i32 = arith.constant 0 : i32
    %c0_i32_0 = arith.constant 0 : i32
    %c0_i32_1 = arith.constant 0 : i32
    return %arg0, %c0_i32, %c0_i32_0 : i32, i32, i32
  }
  func.func @transform_6(%arg0: i32, %arg1: i32, %arg2: memref<2xi32, #tpu.memory_space<smem>>) -> (i32, i32, i32) {
    %c0_i32 = arith.constant 0 : i32
    %c0_i32_0 = arith.constant 0 : i32
    %c0_i32_1 = arith.constant 0 : i32
    return %arg0, %c0_i32, %c0_i32_0 : i32, i32, i32
  }
  func.func @transform_7(%arg0: i32, %arg1: i32, %arg2: memref<2xi32, #tpu.memory_space<smem>>) -> (i32, i32, i32) {
    %c0_i32 = arith.constant 0 : i32
    %c0_i32_0 = arith.constant 0 : i32
    %c0_i32_1 = arith.constant 0 : i32
    return %arg0, %c0_i32, %c0_i32_0 : i32, i32, i32
  }
  func.func @transform_8(%arg0: i32, %arg1: i32, %arg2: memref<2xi32, #tpu.memory_space<smem>>) -> (i32, i32, i32) {
    %c0_i32 = arith.constant 0 : i32
    %c0_i32_0 = arith.constant 0 : i32
    %c0_i32_1 = arith.constant 0 : i32
    return %arg0, %c0_i32, %c0_i32_0 : i32, i32, i32
  }
  func.func @transform_9(%arg0: i32, %arg1: i32, %arg2: memref<2xi32, #tpu.memory_space<smem>>) -> (i32, i32, i32, i32) {
    %c0_i32 = arith.constant 0 : i32
    %c0_i32_0 = arith.constant 0 : i32
    %c0_i32_1 = arith.constant 0 : i32
    return %arg0, %arg1, %c0_i32, %c0_i32_0 : i32, i32, i32, i32
  }
  func.func @transform_10(%arg0: i32, %arg1: i32, %arg2: memref<2xi32, #tpu.memory_space<smem>>) -> (i32, i32, i32) {
    %c0_i32 = arith.constant 0 : i32
    %c0_i32_0 = arith.constant 0 : i32
    %c0_i32_1 = arith.constant 0 : i32
    return %arg0, %c0_i32, %c0_i32_0 : i32, i32, i32
  }
}

</mosaic_0001>

<llo_original>
// kernel: tpu_custom_call.1
$region0: #{tpu_custom_call.1}
  #allocation0 [shape = 'u32[]', space=smem, size = 0x4, offset = 0x4, fixed_abs, tag = 'smem constant byte address 0x4 - core index']
  #allocation1 [shape = 'u32[72,128]{1,0:T(1,128)}', space=vmem, size = 0x9000, scoped, tag = 'internal scratch']
  #allocation2 [shape = 'f32[8,128]{1,0:T(8,128)}', space=vmem, size = 0x1000, scoped, tag = 'scratch operand']
  #allocation3 [shape = 'f32[8,128]{1,0:T(8,128)}', space=vmem, size = 0x1000, scoped, tag = 'scratch operand']
  #allocation4 [shape = 'f32[2,8,128]{2,1,0:T(8,128)}', space=vmem, size = 0x2000, scoped, tag = 'scratch operand']
  #allocation5 [shape = 's32[1]{0}', space=sflag, size = 0x4, scoped, tag = 'scoped memory for tpu_custom_call.1']
  #allocation6 [shape = 'u8[512]{0}', space=smem, size = 0x200, scoped, tag = 'prefetched SMEM operand 0']
  %s0 = inlined_call_operand.hbm [shape: s32[2], index: 0, kind: input, shape index: {}]
  %s1 = inlined_call_operand.hbm [shape: f32[2,8,8,128], index: 1, kind: input, shape index: {}]
  %s2 = inlined_call_operand.hbm [shape: f32[2,8,128], index: 2, kind: input, shape index: {}]
  %s3 = inlined_call_operand.hbm [shape: f32[2,8,128], index: 3, kind: input, shape index: {}]
  %s4 = inlined_call_operand.hbm [shape: f32[2,8,1,128], index: 4, kind: input, shape index: {}]
  %s5 = inlined_call_operand.hbm [shape: f32[2,8,1,128], index: 5, kind: input, shape index: {}]
  %s6 = inlined_call_operand.hbm [shape: f32[2,256,512], index: 6, kind: input, shape index: {}]
  %s7 = inlined_call_operand.hbm [shape: f32[2,1,512], index: 7, kind: input, shape index: {}]
  %s8 = inlined_call_operand.hbm [shape: f32[2,128,128], index: 8, kind: input, shape index: {}]
  %s9 = inlined_call_operand.vmem [shape: f32[2,1,128], index: 9, kind: input, shape index: {}]
  %s10 = inlined_call_operand.hbm [shape: f32[2,8,8,128], index: 10, kind: output, shape index: {0}]
  %s11 = inlined_call_operand.hbm [shape: f32[2,8,128], index: 11, kind: output, shape index: {1}]
  %12 = xla_tuple %s10, %s11
  %s13 = sld [smem:[#allocation0]]
  $region113: #{tpu_custom_call.1} parent=0
    _
  %s15 = ssub.s32 1, %s13
  %s16 = scalar_select 0, %s15, %s13
  %s18 = sshll.u32 %s0, 4
  %s19 = int_to_ptr.hbm [resolvable:$true] %s18
  %21 = dma.hbm_to_smem %s19, 16, [#allocation6], [#allocation5]
  %23 = dma.done [#allocation5], 16
  %24 = sfence
  $region1: #{tpu_custom_call.1} parent=0
    #allocation7 [shape = 'u8[8192]{0}', space=vmem, size = 0x2000, scoped, tag = 'input window, operand 1']
    #allocation8 [shape = 's32[2]{0}', space=sflag, size = 0x8, scoped, tag = 'scoped memory for tpu_custom_call.1']
    #allocation9 [shape = 's32[2]{0}', space=sflag, size = 0x8, scoped, tag = 'scoped memory for tpu_custom_call.1']
    #allocation10 [shape = 'u8[8192]{0}', space=vmem, size = 0x2000, scoped, tag = 'input window, operand 2']
    #allocation11 [shape = 's32[2]{0}', space=sflag, size = 0x8, scoped, tag = 'scoped memory for tpu_custom_call.1']
    #allocation12 [shape = 'u8[8192]{0}', space=vmem, size = 0x2000, scoped, tag = 'input window, operand 3']
    #allocation13 [shape = 'u8[1024]{0}', space=vmem, size = 0x400, scoped, tag = 'input window, operand 4']
    #allocation14 [shape = 's32[2]{0}', space=sflag, size = 0x8, scoped, tag = 'scoped memory for tpu_custom_call.1']
    #allocation15 [shape = 'u8[1024]{0}', space=vmem, size = 0x400, scoped, tag = 'input window, operand 5']
    #allocation16 [shape = 'u8[1048576]{0}', space=vmem, size = 0x100000, scoped, tag = 'input window, operand 6']
    #allocation17 [shape = 's32[2]{0}', space=sflag, size = 0x8, scoped, tag = 'scoped memory for tpu_custom_call.1']
    #allocation18 [shape = 'u8[4096]{0}', space=vmem, size = 0x1000, scoped, tag = 'input window, operand 7']
    #allocation19 [shape = 'u8[131072]{0}', space=vmem, size = 0x20000, scoped, tag = 'input window, operand 8']
    #allocation20 [shape = 's32[2]{0}', space=sflag, size = 0x8, scoped, tag = 'scoped memory for tpu_custom_call.1']
    #allocation21 [shape = 'u8[8192]{0}', space=vmem, size = 0x2000, scoped, tag = 'output window, operand 0']
    #allocation22 [shape = 'u8[8192]{0}', space=vmem, size = 0x2000, scoped, tag = 'output window, operand 1']
    #allocation23 [shape = 's32[2]{0}', space=sflag, size = 0x8, scoped, tag = 'scoped memory for tpu_custom_call.1']
    %25 = vsyncpa [#allocation8], 0
    %s26 = scalar_lea.sflag [#allocation8], 1
    %27 = vsyncpa %s26, 0
    %28 = vsyncpa [#allocation11], 0
    %s29 = scalar_lea.sflag [#allocation11], 1
    %30 = vsyncpa %s29, 0
    %31 = vsyncpa [#allocation14], 0
    %s32 = scalar_lea.sflag [#allocation14], 1
    %33 = vsyncpa %s32, 0
    %34 = vsyncpa [#allocation17], 0
    %s35 = scalar_lea.sflag [#allocation17], 1
    %36 = vsyncpa %s35, 0
    %37 = vsyncpa [#allocation20], 0
    %s38 = scalar_lea.sflag [#allocation20], 1
    %39 = vsyncpa %s38, 0
    %40 = vsyncpa [#allocation9], 0
    %s41 = scalar_lea.sflag [#allocation9], 1
    %42 = vsyncpa %s41, 0
    %43 = vsyncpa [#allocation23], 0
    %s44 = scalar_lea.sflag [#allocation23], 1
    %45 = vsyncpa %s44, 0
    loop: start=0, step=1, limit=18
    $region2: #{tpu_custom_call.1} parent=1 // loop_pre_header
      _
    $region3: #{tpu_custom_call.1} parent=1 // loop_header
      %s47 = sphi 0, %s51
      %p48 = scmp.ge.s32.totalorder %s47, 18
      %s54 = sphi 0, %s66
      %s55 = sphi 0, %s62
      %s56 = sphi 0, %s54
      %s57 = sphi 0, %s55
      %s58 = sphi 0, %s56
      %s59 = sphi 0, %s57
      %s71 = sphi 0, %s73
      %s74 = sphi 0, %s71
      %s75 = sphi 0, %s74
      %s91 = sphi 0, %s75
      %s97 = sphi 0, %s99
      %s100 = sphi 0, %s97
      %s101 = sphi 0, %s100
      %s117 = sphi 0, %s101
      %s123 = sphi 0, %s125
      %s126 = sphi 0, %s123
      %s127 = sphi 0, %s126
      %s143 = sphi 0, %s127
      %s151 = sphi 0, %s153
      %s154 = sphi 0, %s151
      %s155 = sphi 0, %s154
      %s171 = sphi 0, %s155
      %s179 = sphi 0, %s181
      %s182 = sphi 0, %s179
      %s183 = sphi 0, %s182
      %s199 = sphi 0, %s183
      %s205 = sphi 0, %s207
      %s208 = sphi 0, %s205
      %s209 = sphi 0, %s208
      %s225 = sphi 0, %s209
      %s231 = sphi 0, %s233
      %s234 = sphi 0, %s231
      %s235 = sphi 0, %s234
      %s251 = sphi 0, %s235
      %s257 = sphi 0, %s259
      %s260 = sphi 0, %s257
      %s261 = sphi 0, %s260
      %s277 = sphi 0, %s261
      %s283 = sphi 0, %s285
      %s286 = sphi 0, %s283
      %s287 = sphi 0, %s286
      %s303 = sphi 0, %s287
      %s311 = sphi 0, %s313
      %s314 = sphi 0, %s311
      %s315 = sphi 0, %s314
      %s331 = sphi 0, %s315
      %s337 = sphi 0, %s339
      %s340 = sphi 0, %s337
      %s341 = sphi 0, %s340
      %s357 = sphi 0, %s341
    $region4: #{tpu_custom_call.1} parent=1 // loop_header_branch
      %50 = sbr.rel (%p48) target = $region8
    $region5: #{tpu_custom_call.1} parent=1 // loop_body
      %s52 = ssub.s32 %s47, 1
      %s53 = ssub.s32 %s47, 2
      %s60 = sadd.s32 1, %s55
      %p61 = scmp.ge.s32.totalorder %s60, 8
      %s62 = scalar_select %p61, 0, %s60
      %s63 = sadd.s32 1, %s54
      %s64 = scalar_select %p61, %s63, %s54
      %p65 = scmp.ge.s32.totalorder %s64, 2
      %s66 = scalar_select %p65, 0, %s64
      %s67 = ssub.s32 %s54, %s66
      %s68 = ssub.s32 %s55, %s62
      %s69 = sor.u32 %s67, %s68
      %p70 = scmp.eq.s32.totalorder %s69, 0
      %s72 = sadd.s32 %s71, 1
      %s73 = scalar_select %p70, %s71, %s72
      %p76 = pneg %p70
      %p77 = scmp.eq.s32.totalorder %s47, 15
      %p78 = por %p76, %p77
      %p79 = scmp.ne.s32.totalorder %s71, %s74
      %p80 = scmp.eq.s32.totalorder %s47, 0
      %p81 = por %p79, %p80
      %p82 = scmp.ne.s32.totalorder %s71, %s74
      %p83 = scmp.eq.s32.totalorder %s52, 15
      %p84 = por %p82, %p83
      %p85 = scmp.ne.s32.totalorder %s74, %s75
      %p86 = scmp.eq.s32.totalorder %s52, 0
      %p87 = por %p85, %p86
      %p88 = scmp.ne.s32.totalorder %s74, %s75
      %p89 = scmp.eq.s32.totalorder %s53, 15
      %p90 = por %p88, %p89
      %p92 = scmp.ne.s32.totalorder %s75, %s91
      %p93 = scmp.eq.s32.totalorder %s53, 0
      %p94 = por %p92, %p93
      %s95 = ssub.s32 %s54, %s66
      %p96 = scmp.eq.s32.totalorder %s95, 0
      %s98 = sadd.s32 %s97, 1
      %s99 = scalar_select %p96, %s97, %s98
      %p102 = pneg %p96
      %p103 = scmp.eq.s32.totalorder %s47, 15
      %p104 = por %p102, %p103
      %p105 = scmp.ne.s32.totalorder %s97, %s100
      %p106 = scmp.eq.s32.totalorder %s47, 0
      %p107 = por %p105, %p106
      %p108 = scmp.ne.s32.totalorder %s97, %s100
      %p109 = scmp.eq.s32.totalorder %s52, 15
      %p110 = por %p108, %p109
      %p111 = scmp.ne.s32.totalorder %s100, %s101
      %p112 = scmp.eq.s32.totalorder %s52, 0
      %p113 = por %p111, %p112
      %p114 = scmp.ne.s32.totalorder %s100, %s101
      %p115 = scmp.eq.s32.totalorder %s53, 15
      %p116 = por %p114, %p115
      %p118 = scmp.ne.s32.totalorder %s101, %s117
      %p119 = scmp.eq.s32.totalorder %s53, 0
      %p120 = por %p118, %p119
      %s121 = ssub.s32 %s54, %s66
      %p122 = scmp.eq.s32.totalorder %s121, 0
      %s124 = sadd.s32 %s123, 1
      %s125 = scalar_select %p122, %s123, %s124
      %p128 = pneg %p122
      %p129 = scmp.eq.s32.totalorder %s47, 15
      %p130 = por %p128, %p129
      %p131 = scmp.ne.s32.totalorder %s123, %s126
      %p132 = scmp.eq.s32.totalorder %s47, 0
      %p133 = por %p131, %p132
      %p134 = scmp.ne.s32.totalorder %s123, %s126
      %p135 = scmp.eq.s32.totalorder %s52, 15
      %p136 = por %p134, %p135
      %p137 = scmp.ne.s32.totalorder %s126, %s127
      %p138 = scmp.eq.s32.totalorder %s52, 0
      %p139 = por %p137, %p138
      %p140 = scmp.ne.s32.totalorder %s126, %s127
      %p141 = scmp.eq.s32.totalorder %s53, 15
      %p142 = por %p140, %p141
      %p144 = scmp.ne.s32.totalorder %s127, %s143
      %p145 = scmp.eq.s32.totalorder %s53, 0
      %p146 = por %p144, %p145
      %s147 = ssub.s32 %s54, %s66
      %s148 = ssub.s32 %s55, %s62
      %s149 = sor.u32 %s147, %s148
      %p150 = scmp.eq.s32.totalorder %s149, 0
      %s152 = sadd.s32 %s151, 1
      %s153 = scalar_select %p150, %s151, %s152
      %p156 = pneg %p150
      %p157 = scmp.eq.s32.totalorder %s47, 15
      %p158 = por %p156, %p157
      %p159 = scmp.ne.s32.totalorder %s151, %s154
      %p160 = scmp.eq.s32.totalorder %s47, 0
      %p161 = por %p159, %p160
      %p162 = scmp.ne.s32.totalorder %s151, %s154
      %p163 = scmp.eq.s32.totalorder %s52, 15
      %p164 = por %p162, %p163
      %p165 = scmp.ne.s32.totalorder %s154, %s155
      %p166 = scmp.eq.s32.totalorder %s52, 0
      %p167 = por %p165, %p166
      %p168 = scmp.ne.s32.totalorder %s154, %s155
      %p169 = scmp.eq.s32.totalorder %s53, 15
      %p170 = por %p168, %p169
      %p172 = scmp.ne.s32.totalorder %s155, %s171
      %p173 = scmp.eq.s32.totalorder %s53, 0
      %p174 = por %p172, %p173
      %s175 = ssub.s32 %s54, %s66
      %s176 = ssub.s32 %s55, %s62
      %s177 = sor.u32 %s175, %s176
      %p178 = scmp.eq.s32.totalorder %s177, 0
      %s180 = sadd.s32 %s179, 1
      %s181 = scalar_select %p178, %s179, %s180
      %p184 = pneg %p178
      %p185 = scmp.eq.s32.totalorder %s47, 15
      %p186 = por %p184, %p185
      %p187 = scmp.ne.s32.totalorder %s179, %s182
      %p188 = scmp.eq.s32.totalorder %s47, 0
      %p189 = por %p187, %p188
      %p190 = scmp.ne.s32.totalorder %s179, %s182
      %p191 = scmp.eq.s32.totalorder %s52, 15
      %p192 = por %p190, %p191
      %p193 = scmp.ne.s32.totalorder %s182, %s183
      %p194 = scmp.eq.s32.totalorder %s52, 0
      %p195 = por %p193, %p194
      %p196 = scmp.ne.s32.totalorder %s182, %s183
      %p197 = scmp.eq.s32.totalorder %s53, 15
      %p198 = por %p196, %p197
      %p200 = scmp.ne.s32.totalorder %s183, %s199
      %p201 = scmp.eq.s32.totalorder %s53, 0
      %p202 = por %p200, %p201
      %s203 = ssub.s32 %s54, %s66
      %p204 = scmp.eq.s32.totalorder %s203, 0
      %s206 = sadd.s32 %s205, 1
      %s207 = scalar_select %p204, %s205, %s206
      %p210 = pneg %p204
      %p211 = scmp.eq.s32.totalorder %s47, 15
      %p212 = por %p210, %p211
      %p213 = scmp.ne.s32.totalorder %s205, %s208
      %p214 = scmp.eq.s32.totalorder %s47, 0
      %p215 = por %p213, %p214
      %p216 = scmp.ne.s32.totalorder %s205, %s208
      %p217 = scmp.eq.s32.totalorder %s52, 15
      %p218 = por %p216, %p217
      %p219 = scmp.ne.s32.totalorder %s208, %s209
      %p220 = scmp.eq.s32.totalorder %s52, 0
      %p221 = por %p219, %p220
      %p222 = scmp.ne.s32.totalorder %s208, %s209
      %p223 = scmp.eq.s32.totalorder %s53, 15
      %p224 = por %p222, %p223
      %p226 = scmp.ne.s32.totalorder %s209, %s225
      %p227 = scmp.eq.s32.totalorder %s53, 0
      %p228 = por %p226, %p227
      %s229 = ssub.s32 %s54, %s66
      %p230 = scmp.eq.s32.totalorder %s229, 0
      %s232 = sadd.s32 %s231, 1
      %s233 = scalar_select %p230, %s231, %s232
      %p236 = pneg %p230
      %p237 = scmp.eq.s32.totalorder %s47, 15
      %p238 = por %p236, %p237
      %p239 = scmp.ne.s32.totalorder %s231, %s234
      %p240 = scmp.eq.s32.totalorder %s47, 0
      %p241 = por %p239, %p240
      %p242 = scmp.ne.s32.totalorder %s231, %s234
      %p243 = scmp.eq.s32.totalorder %s52, 15
      %p244 = por %p242, %p243
      %p245 = scmp.ne.s32.totalorder %s234, %s235
      %p246 = scmp.eq.s32.totalorder %s52, 0
      %p247 = por %p245, %p246
      %p248 = scmp.ne.s32.totalorder %s234, %s235
      %p249 = scmp.eq.s32.totalorder %s53, 15
      %p250 = por %p248, %p249
      %p252 = scmp.ne.s32.totalorder %s235, %s251
      %p253 = scmp.eq.s32.totalorder %s53, 0
      %p254 = por %p252, %p253
      %s255 = ssub.s32 %s54, %s66
      %p256 = scmp.eq.s32.totalorder %s255, 0
      %s258 = sadd.s32 %s257, 1
      %s259 = scalar_select %p256, %s257, %s258
      %p262 = pneg %p256
      %p263 = scmp.eq.s32.totalorder %s47, 15
      %p264 = por %p262, %p263
      %p265 = scmp.ne.s32.totalorder %s257, %s260
      %p266 = scmp.eq.s32.totalorder %s47, 0
      %p267 = por %p265, %p266
      %p268 = scmp.ne.s32.totalorder %s257, %s260
      %p269 = scmp.eq.s32.totalorder %s52, 15
      %p270 = por %p268, %p269
      %p271 = scmp.ne.s32.totalorder %s260, %s261
      %p272 = scmp.eq.s32.totalorder %s52, 0
      %p273 = por %p271, %p272
      %p274 = scmp.ne.s32.totalorder %s260, %s261
      %p275 = scmp.eq.s32.totalorder %s53, 15
      %p276 = por %p274, %p275
      %p278 = scmp.ne.s32.totalorder %s261, %s277
      %p279 = scmp.eq.s32.totalorder %s53, 0
      %p280 = por %p278, %p279
      %s281 = ssub.s32 %s54, %s66
      %p282 = scmp.eq.s32.totalorder %s281, 0
      %s284 = sadd.s32 %s283, 1
      %s285 = scalar_select %p282, %s283, %s284
      %p288 = pneg %p282
      %p289 = scmp.eq.s32.totalorder %s47, 15
      %p290 = por %p288, %p289
      %p291 = scmp.ne.s32.totalorder %s283, %s286
      %p292 = scmp.eq.s32.totalorder %s47, 0
      %p293 = por %p291, %p292
      %p294 = scmp.ne.s32.totalorder %s283, %s286
      %p295 = scmp.eq.s32.totalorder %s52, 15
      %p296 = por %p294, %p295
      %p297 = scmp.ne.s32.totalorder %s286, %s287
      %p298 = scmp.eq.s32.totalorder %s52, 0
      %p299 = por %p297, %p298
      %p300 = scmp.ne.s32.totalorder %s286, %s287
      %p301 = scmp.eq.s32.totalorder %s53, 15
      %p302 = por %p300, %p301
      %p304 = scmp.ne.s32.totalorder %s287, %s303
      %p305 = scmp.eq.s32.totalorder %s53, 0
      %p306 = por %p304, %p305
      %s307 = ssub.s32 %s54, %s66
      %s308 = ssub.s32 %s55, %s62
      %s309 = sor.u32 %s307, %s308
      %p310 = scmp.eq.s32.totalorder %s309, 0
      %s312 = sadd.s32 %s311, 1
      %s313 = scalar_select %p310, %s311, %s312
      %p316 = pneg %p310
      %p317 = scmp.eq.s32.totalorder %s47, 15
      %p318 = por %p316, %p317
      %p319 = scmp.ne.s32.totalorder %s311, %s314
      %p320 = scmp.eq.s32.totalorder %s47, 0
      %p321 = por %p319, %p320
      %p322 = scmp.ne.s32.totalorder %s311, %s314
      %p323 = scmp.eq.s32.totalorder %s52, 15
      %p324 = por %p322, %p323
      %p325 = scmp.ne.s32.totalorder %s314, %s315
      %p326 = scmp.eq.s32.totalorder %s52, 0
      %p327 = por %p325, %p326
      %p328 = scmp.ne.s32.totalorder %s314, %s315
      %p329 = scmp.eq.s32.totalorder %s53, 15
      %p330 = por %p328, %p329
      %p332 = scmp.ne.s32.totalorder %s315, %s331
      %p333 = scmp.eq.s32.totalorder %s53, 0
      %p334 = por %p332, %p333
      %s335 = ssub.s32 %s54, %s66
      %p336 = scmp.eq.s32.totalorder %s335, 0
      %s338 = sadd.s32 %s337, 1
      %s339 = scalar_select %p336, %s337, %s338
      %p342 = pneg %p336
      %p343 = scmp.eq.s32.totalorder %s47, 15
      %p344 = por %p342, %p343
      %p345 = scmp.ne.s32.totalorder %s337, %s340
      %p346 = scmp.eq.s32.totalorder %s47, 0
      %p347 = por %p345, %p346
      %p348 = scmp.ne.s32.totalorder %s337, %s340
      %p349 = scmp.eq.s32.totalorder %s52, 15
      %p350 = por %p348, %p349
      %p351 = scmp.ne.s32.totalorder %s340, %s341
      %p352 = scmp.eq.s32.totalorder %s52, 0
      %p353 = por %p351, %p352
      %p354 = scmp.ne.s32.totalorder %s340, %s341
      %p355 = scmp.eq.s32.totalorder %s53, 15
      %p356 = por %p354, %p355
      %p358 = scmp.ne.s32.totalorder %s341, %s357
      %p359 = scmp.eq.s32.totalorder %s53, 0
      %p360 = por %p358, %p359
      %p361 = scmp.le.s32.totalorder 1, %s47
      %p362 = scmp.lt.s32.totalorder %s47, 17
      %p363 = pnand %p361, %p362
      %p364 = pneg %p363
      // Predicated region
      $region9: #{tpu_custom_call.1} parent=5 // pred_check
        _
      $region10: #{tpu_custom_call.1} parent=5 // pred_check_branch
        %366 = sbr.rel (%p363) target = $region12
      $region11: #{tpu_custom_call.1} parent=5 // pred_region
        %s367 = ssub.s32 %s47, 1
      $region12: #{tpu_custom_call.1} parent=5 // pred_fallthru
        _
      %p368 = scmp.lt.s32.totalorder %s47, 16
      // Predicated region
      $region13: #{tpu_custom_call.1} parent=5 // pred_check
        %p369 = pneg %p368
      $region14: #{tpu_custom_call.1} parent=5 // pred_check_branch
        %371 = sbr.rel (%p369) target = $region16
      $region15: #{tpu_custom_call.1} parent=5 // pred_region
        // Predicated region
        $region17: #{tpu_custom_call.1} parent=15 // pred_check
          %p372 = pneg %p81
        $region18: #{tpu_custom_call.1} parent=15 // pred_check_branch
          %374 = sbr.rel (%p372) target = $region20
        $region19: #{tpu_custom_call.1} parent=15 // pred_region
          %s375 = sand.u32 %s71, 1
          %s376 = scalar_lea.sflag [#allocation8], %s375
          %s377 = sand.u32 %s71, 1
          %s378 = smul.addr %s377, 8
          %s379 = scalar_lea.vmem [#allocation7], %s378
          %381 = vsyncadd %s376, 0
          %s382 = smul.addr %s54, 8
          %s383 = sadd.s32 %s55, %s382
          %s384 = smul.addr %s383, 8
          %s385 = scalar_lea.hbm %s1, %s384
          %s387 = sshll.u32 %s385, 4
          %s388 = int_to_ptr.hbm [resolvable:$true] %s387
          %s389 = sshll.u32 %s379, 4
          %s390 = int_to_ptr.vmem [resolvable:$true] %s389
          %392 = dma.hbm_to_vmem [thread:$0]  %s388, 128, %s390, %s376
        $region20: #{tpu_custom_call.1} parent=15 // pred_fallthru
          _
        // Predicated region
        $region21: #{tpu_custom_call.1} parent=15 // pred_check
          %p393 = pneg %p107
        $region22: #{tpu_custom_call.1} parent=15 // pred_check_branch
          %395 = sbr.rel (%p393) target = $region24
        $region23: #{tpu_custom_call.1} parent=15 // pred_region
          %s396 = sand.u32 %s47, 1
          %s397 = scalar_lea.sflag [#allocation11], %s396
          %s398 = sand.u32 %s97, 1
          %s399 = smul.addr %s398, 8
          %s400 = scalar_lea.vmem [#allocation10], %s399
          %402 = vsyncadd %s397, 0
          %s403 = smul.addr %s54, 8
          %s404 = scalar_lea.hbm %s2, %s403
          %s406 = sshll.u32 %s404, 4
          %s407 = int_to_ptr.hbm [resolvable:$true] %s406
          %s408 = sshll.u32 %s400, 4
          %s409 = int_to_ptr.vmem [resolvable:$true] %s408
          %411 = dma.hbm_to_vmem [thread:$0]  %s407, 128, %s409, %s397
        $region24: #{tpu_custom_call.1} parent=15 // pred_fallthru
          _
        // Predicated region
        $region25: #{tpu_custom_call.1} parent=15 // pred_check
          %p412 = pneg %p133
        $region26: #{tpu_custom_call.1} parent=15 // pred_check_branch
          %414 = sbr.rel (%p412) target = $region28
        $region27: #{tpu_custom_call.1} parent=15 // pred_region
          %s415 = sand.u32 %s47, 1
          %s416 = scalar_lea.sflag [#allocation11], %s415
          %s417 = sand.u32 %s123, 1
          %s418 = smul.addr %s417, 8
          %s419 = scalar_lea.vmem [#allocation12], %s418
          %421 = vsyncadd %s416, 0
          %s422 = smul.addr %s54, 8
          %s423 = scalar_lea.hbm %s3, %s422
          %s425 = sshll.u32 %s423, 4
          %s426 = int_to_ptr.hbm [resolvable:$true] %s425
          %s427 = sshll.u32 %s419, 4
          %s428 = int_to_ptr.vmem [resolvable:$true] %s427
          %430 = dma.hbm_to_vmem [thread:$0]  %s426, 128, %s428, %s416
        $region28: #{tpu_custom_call.1} parent=15 // pred_fallthru
          _
        // Predicated region
        $region29: #{tpu_custom_call.1} parent=15 // pred_check
          %p431 = pneg %p161
        $region30: #{tpu_custom_call.1} parent=15 // pred_check_branch
          %433 = sbr.rel (%p431) target = $region32
        $region31: #{tpu_custom_call.1} parent=15 // pred_region
          %s434 = sand.u32 %s47, 1
          %s435 = scalar_lea.sflag [#allocation14], %s434
          %s436 = sand.u32 %s151, 1
          %s437 = scalar_lea.vmem [#allocation13], %s436
          %439 = vsyncadd %s435, 0
          %s440 = smul.addr %s54, 8
          %s441 = sadd.s32 %s55, %s440
          %s442 = scalar_lea.hbm %s4, %s441
          %s444 = sshll.u32 %s442, 4
          %s445 = int_to_ptr.hbm [resolvable:$true] %s444
          %s446 = sshll.u32 %s437, 4
          %s447 = int_to_ptr.vmem [resolvable:$true] %s446
          %449 = dma.hbm_to_vmem [thread:$0]  %s445, 16, %s447, %s435
        $region32: #{tpu_custom_call.1} parent=15 // pred_fallthru
          _
        // Predicated region
        $region33: #{tpu_custom_call.1} parent=15 // pred_check
          %p450 = pneg %p189
        $region34: #{tpu_custom_call.1} parent=15 // pred_check_branch
          %452 = sbr.rel (%p450) target = $region36
        $region35: #{tpu_custom_call.1} parent=15 // pred_region
          %s453 = sand.u32 %s47, 1
          %s454 = scalar_lea.sflag [#allocation14], %s453
          %s455 = sand.u32 %s179, 1
          %s456 = scalar_lea.vmem [#allocation15], %s455
          %458 = vsyncadd %s454, 0
          %s459 = smul.addr %s54, 8
          %s460 = sadd.s32 %s55, %s459
          %s461 = scalar_lea.hbm %s5, %s460
          %s463 = sshll.u32 %s461, 4
          %s464 = int_to_ptr.hbm [resolvable:$true] %s463
          %s465 = sshll.u32 %s456, 4
          %s466 = int_to_ptr.vmem [resolvable:$true] %s465
          %468 = dma.hbm_to_vmem [thread:$0]  %s464, 16, %s466, %s454
        $region36: #{tpu_custom_call.1} parent=15 // pred_fallthru
          _
        // Predicated region
        $region37: #{tpu_custom_call.1} parent=15 // pred_check
          %p469 = pneg %p215
        $region38: #{tpu_custom_call.1} parent=15 // pred_check_branch
          %471 = sbr.rel (%p469) target = $region40
        $region39: #{tpu_custom_call.1} parent=15 // pred_region
          %s472 = sand.u32 %s47, 1
          %s473 = scalar_lea.sflag [#allocation17], %s472
          %s474 = sand.u32 %s205, 1
          %s475 = smul.addr %s474, 1024
          %s476 = scalar_lea.vmem [#allocation16], %s475
          %478 = vsyncadd %s473, 0
          %s479 = smul.addr %s54, 128
          %s480 = smul.addr %s479, 8
          %s481 = scalar_lea.hbm %s6, %s480
          %s482 = sshll.u32 %s481, 4
          %s483 = int_to_ptr.hbm [resolvable:$true] %s482
          %s484 = sshll.u32 %s476, 4
          %s485 = int_to_ptr.vmem [resolvable:$true] %s484
          %490 = dma.hbm_to_vmem [thread:$0]  %s483, 16384, %s485, %s473, 512, 512, 32
        $region40: #{tpu_custom_call.1} parent=15 // pred_fallthru
          _
        // Predicated region
        $region41: #{tpu_custom_call.1} parent=15 // pred_check
          %p491 = pneg %p241
        $region42: #{tpu_custom_call.1} parent=15 // pred_check_branch
          %493 = sbr.rel (%p491) target = $region44
        $region43: #{tpu_custom_call.1} parent=15 // pred_region
          %s494 = sand.u32 %s47, 1
          %s495 = scalar_lea.sflag [#allocation17], %s494
          %s496 = sand.u32 %s231, 1
          %s497 = smul.addr %s496, 4
          %s498 = scalar_lea.vmem [#allocation18], %s497
          %500 = vsyncadd %s495, 0
          %s501 = smul.addr %s54, 4
          %s502 = scalar_lea.hbm %s7, %s501
          %s504 = sshll.u32 %s502, 4
          %s505 = int_to_ptr.hbm [resolvable:$true] %s504
          %s506 = sshll.u32 %s498, 4
          %s507 = int_to_ptr.vmem [resolvable:$true] %s506
          %509 = dma.hbm_to_vmem [thread:$0]  %s505, 64, %s507, %s495
        $region44: #{tpu_custom_call.1} parent=15 // pred_fallthru
          _
        // Predicated region
        $region45: #{tpu_custom_call.1} parent=15 // pred_check
          %p510 = pneg %p267
        $region46: #{tpu_custom_call.1} parent=15 // pred_check_branch
          %512 = sbr.rel (%p510) target = $region48
        $region47: #{tpu_custom_call.1} parent=15 // pred_region
          %s513 = sand.u32 %s257, 1
          %s514 = scalar_lea.sflag [#allocation20], %s513
          %s515 = sand.u32 %s257, 1
          %s516 = smul.addr %s515, 128
          %s517 = scalar_lea.vmem [#allocation19], %s516
          %519 = vsyncadd %s514, 0
          %s520 = smul.addr %s54, 16
          %s521 = smul.addr %s520, 8
          %s522 = scalar_lea.hbm %s8, %s521
          %s523 = sshll.u32 %s522, 4
          %s524 = int_to_ptr.hbm [resolvable:$true] %s523
          %s525 = sshll.u32 %s517, 4
          %s526 = int_to_ptr.vmem [resolvable:$true] %s525
          %531 = dma.hbm_to_vmem [thread:$0]  %s524, 2048, %s526, %s514, 128, 128, 8
        $region48: #{tpu_custom_call.1} parent=15 // pred_fallthru
          _
        // Predicated region
        $region49: #{tpu_custom_call.1} parent=15 // pred_check
          %p532 = pneg %p293
        $region50: #{tpu_custom_call.1} parent=15 // pred_check_branch
          %534 = sbr.rel (%p532) target = $region52
        $region51: #{tpu_custom_call.1} parent=15 // pred_region
          %p535 = scmp.lt.s32.totalorder %s54, 1
          %s536 = scalar_select %p535, %s54, 1
          %s537 = scalar_lea.vmem %s9, %s536
        $region52: #{tpu_custom_call.1} parent=15 // pred_fallthru
          _
      $region16: #{tpu_custom_call.1} parent=5 // pred_fallthru
        _
      %p538 = scmp.le.s32.totalorder 1, %s47
      %p539 = scmp.lt.s32.totalorder %s47, 17
      %p540 = pnand %p538, %p539
      %p541 = pneg %p540
      // Predicated region
      $region53: #{tpu_custom_call.1} parent=5 // pred_check
        _
      $region54: #{tpu_custom_call.1} parent=5 // pred_check_branch
        %543 = sbr.rel (%p540) target = $region56
      $region55: #{tpu_custom_call.1} parent=5 // pred_region
        %s544 = ssub.s32 %s47, 1
        %s545 = sand.u32 %s74, 1
        %s546 = scalar_lea.sflag [#allocation8], %s545
        %s547 = sand.u32 %s74, 1
        %s548 = smul.addr %s547, 8
        %s549 = scalar_lea.vmem [#allocation7], %s548
        // Predicated region
        $region57: #{tpu_custom_call.1} parent=55 // pred_check
          %p550 = pneg %p87
        $region58: #{tpu_custom_call.1} parent=55 // pred_check_branch
          %552 = sbr.rel (%p550) target = $region60
        $region59: #{tpu_custom_call.1} parent=55 // pred_region
          %554 = dma.done %s546, 128
        $region60: #{tpu_custom_call.1} parent=55 // pred_fallthru
          _
        %s555 = sand.u32 %s52, 1
        %s556 = scalar_lea.sflag [#allocation11], %s555
        %s557 = sand.u32 %s100, 1
        %s558 = smul.addr %s557, 8
        %s559 = scalar_lea.vmem [#allocation10], %s558
        // Predicated region
        $region61: #{tpu_custom_call.1} parent=55 // pred_check
          %p560 = pneg %p113
        $region62: #{tpu_custom_call.1} parent=55 // pred_check_branch
          %562 = sbr.rel (%p560) target = $region64
        $region63: #{tpu_custom_call.1} parent=55 // pred_region
          %564 = dma.done %s556, 128
        $region64: #{tpu_custom_call.1} parent=55 // pred_fallthru
          _
        %s565 = sand.u32 %s52, 1
        %s566 = scalar_lea.sflag [#allocation11], %s565
        %s567 = sand.u32 %s126, 1
        %s568 = smul.addr %s567, 8
        %s569 = scalar_lea.vmem [#allocation12], %s568
        // Predicated region
        $region65: #{tpu_custom_call.1} parent=55 // pred_check
          %p570 = pneg %p139
        $region66: #{tpu_custom_call.1} parent=55 // pred_check_branch
          %572 = sbr.rel (%p570) target = $region68
        $region67: #{tpu_custom_call.1} parent=55 // pred_region
          %574 = dma.done %s566, 128
        $region68: #{tpu_custom_call.1} parent=55 // pred_fallthru
          _
        %s575 = sand.u32 %s52, 1
        %s576 = scalar_lea.sflag [#allocation14], %s575
        %s577 = sand.u32 %s154, 1
        %s578 = scalar_lea.vmem [#allocation13], %s577
        // Predicated region
        $region69: #{tpu_custom_call.1} parent=55 // pred_check
          %p579 = pneg %p167
        $region70: #{tpu_custom_call.1} parent=55 // pred_check_branch
          %581 = sbr.rel (%p579) target = $region72
        $region71: #{tpu_custom_call.1} parent=55 // pred_region
          %583 = dma.done %s576, 16
        $region72: #{tpu_custom_call.1} parent=55 // pred_fallthru
          _
        %s584 = sand.u32 %s52, 1
        %s585 = scalar_lea.sflag [#allocation14], %s584
        %s586 = sand.u32 %s182, 1
        %s587 = scalar_lea.vmem [#allocation15], %s586
        // Predicated region
        $region73: #{tpu_custom_call.1} parent=55 // pred_check
          %p588 = pneg %p195
        $region74: #{tpu_custom_call.1} parent=55 // pred_check_branch
          %590 = sbr.rel (%p588) target = $region76
        $region75: #{tpu_custom_call.1} parent=55 // pred_region
          %592 = dma.done %s585, 16
        $region76: #{tpu_custom_call.1} parent=55 // pred_fallthru
          _
        %s593 = sand.u32 %s52, 1
        %s594 = scalar_lea.sflag [#allocation17], %s593
        %s595 = sand.u32 %s208, 1
        %s596 = smul.addr %s595, 1024
        %s597 = scalar_lea.vmem [#allocation16], %s596
        // Predicated region
        $region77: #{tpu_custom_call.1} parent=55 // pred_check
          %p598 = pneg %p221
        $region78: #{tpu_custom_call.1} parent=55 // pred_check_branch
          %600 = sbr.rel (%p598) target = $region80
        $region79: #{tpu_custom_call.1} parent=55 // pred_region
          %602 = dma.done %s594, 16384
        $region80: #{tpu_custom_call.1} parent=55 // pred_fallthru
          _
        %s603 = sand.u32 %s52, 1
        %s604 = scalar_lea.sflag [#allocation17], %s603
        %s605 = sand.u32 %s234, 1
        %s606 = smul.addr %s605, 4
        %s607 = scalar_lea.vmem [#allocation18], %s606
        // Predicated region
        $region81: #{tpu_custom_call.1} parent=55 // pred_check
          %p608 = pneg %p247
        $region82: #{tpu_custom_call.1} parent=55 // pred_check_branch
          %610 = sbr.rel (%p608) target = $region84
        $region83: #{tpu_custom_call.1} parent=55 // pred_region
          %612 = dma.done %s604, 64
        $region84: #{tpu_custom_call.1} parent=55 // pred_fallthru
          _
        %s613 = sand.u32 %s260, 1
        %s614 = scalar_lea.sflag [#allocation20], %s613
        %s615 = sand.u32 %s260, 1
        %s616 = smul.addr %s615, 128
        %s617 = scalar_lea.vmem [#allocation19], %s616
        // Predicated region
        $region85: #{tpu_custom_call.1} parent=55 // pred_check
          %p618 = pneg %p273
        $region86: #{tpu_custom_call.1} parent=55 // pred_check_branch
          %620 = sbr.rel (%p618) target = $region88
        $region87: #{tpu_custom_call.1} parent=55 // pred_region
          %622 = dma.done %s614, 2048
        $region88: #{tpu_custom_call.1} parent=55 // pred_fallthru
          _
        %s623 = sand.u32 %s74, 1
        %s624 = scalar_lea.sflag [#allocation8], %s623
        %s625 = sand.u32 %s74, 1
        %s626 = smul.addr %s625, 8
        %s627 = scalar_lea.vmem [#allocation7], %s626
        %p628 = pneg %p87
        %p629 = pneg %p84
        %s630 = sand.u32 %s52, 1
        %s631 = scalar_lea.sflag [#allocation11], %s630
        %s632 = sand.u32 %s100, 1
        %s633 = smul.addr %s632, 8
        %s634 = scalar_lea.vmem [#allocation10], %s633
        %p635 = pneg %p113
        %p636 = pneg %p110
        %s637 = sand.u32 %s52, 1
        %s638 = scalar_lea.sflag [#allocation11], %s637
        %s639 = sand.u32 %s126, 1
        %s640 = smul.addr %s639, 8
        %s641 = scalar_lea.vmem [#allocation12], %s640
        %p642 = pneg %p139
        %p643 = pneg %p136
        %s644 = sand.u32 %s52, 1
        %s645 = scalar_lea.sflag [#allocation14], %s644
        %s646 = sand.u32 %s154, 1
        %s647 = scalar_lea.vmem [#allocation13], %s646
        %p648 = pneg %p167
        %p649 = pneg %p164
        %s650 = sand.u32 %s52, 1
        %s651 = scalar_lea.sflag [#allocation14], %s650
        %s652 = sand.u32 %s182, 1
        %s653 = scalar_lea.vmem [#allocation15], %s652
        %p654 = pneg %p195
        %p655 = pneg %p192
        %s656 = sand.u32 %s52, 1
        %s657 = scalar_lea.sflag [#allocation17], %s656
        %s658 = sand.u32 %s208, 1
        %s659 = smul.addr %s658, 1024
        %s660 = scalar_lea.vmem [#allocation16], %s659
        %p661 = pneg %p221
        %p662 = pneg %p218
        %s663 = sand.u32 %s52, 1
        %s664 = scalar_lea.sflag [#allocation17], %s663
        %s665 = sand.u32 %s234, 1
        %s666 = smul.addr %s665, 4
        %s667 = scalar_lea.vmem [#allocation18], %s666
        %p668 = pneg %p247
        %p669 = pneg %p244
        %s670 = sand.u32 %s260, 1
        %s671 = scalar_lea.sflag [#allocation20], %s670
        %s672 = sand.u32 %s260, 1
        %s673 = smul.addr %s672, 128
        %s674 = scalar_lea.vmem [#allocation19], %s673
        %p675 = pneg %p273
        %p676 = pneg %p270
        %p677 = scmp.lt.s32.totalorder %s56, 1
        %s678 = scalar_select %p677, %s56, 1
        %s679 = scalar_lea.vmem %s9, %s678
        %p680 = pneg %p299
        %p681 = pneg %p296
        %p682 = pneg %p327
        %p683 = pneg %p324
        %s684 = sand.u32 %s314, 1
        %s685 = scalar_lea.sflag [#allocation9], %s684
        %s686 = sand.u32 %s314, 1
        %s687 = smul.addr %s686, 8
        %s688 = scalar_lea.vmem [#allocation21], %s687
        %p689 = pneg %p353
        %p690 = pneg %p350
        %s691 = sand.u32 %s340, 1
        %s692 = scalar_lea.sflag [#allocation23], %s691
        %s693 = sand.u32 %s340, 1
        %s694 = smul.addr %s693, 8
        %s695 = scalar_lea.vmem [#allocation22], %s694
        %p696 = scmp.lt.s32.totalorder %s56, 1
        %s697 = scalar_select %p696, %s56, 1
        %s698 = scalar_lea.vmem %s9, %s697
        %s699 = sld [smem:[#allocation6 + %s56]]
        %p700 = scmp.eq.s32.totalorder %s57, 0
        // Predicated region
        $region89: #{tpu_custom_call.1} parent=55 // pred_check
          %p701 = pneg %p700
        $region90: #{tpu_custom_call.1} parent=55 // pred_check_branch
          %703 = sbr.rel (%p701) target = $region92
        $region91: #{tpu_custom_call.1} parent=55 // pred_region
          %v704 = vld [vmem:[%s559] sm:$0xff]
          %705 = vst [vmem:[#allocation2] sm:$0xff] %v704
          %v706 = vld [vmem:[%s569] sm:$0xff]
          %707 = vst [vmem:[#allocation3] sm:$0xff] %v706
          %708 = vst [vmem:[#allocation4] sm:$0xff] 0.0
          %709 = vst [vmem:[#allocation4 + $0x8] sm:$0xff] 0.0
        $region92: #{tpu_custom_call.1} parent=55 // pred_fallthru
          _
        %v710 = vld [vmem:[#allocation2] sm:$0xff]
        %v711 = vld [vmem:[#allocation3] sm:$0xff]
        %v712 = vld [vmem:[%s549] sm:$0xff]
        %s713 = ssub.s32 %s57, %s699
        %s714 = sadd.s32 %s713, 2
        %p715 = scmp.lt.s32.totalorder %s714, 0
        %s716 = ssub.s32 0, %s714
        %s717 = scalar_select %p715, %s716, %s714
        %s718 = sand.u32 %s717, 1
        %s719 = ssub.s32 0, %s718
        %s720 = scalar_select %p715, %s719, %s718
        %s721 = smul.u32 %s720, 8
        %s722 = scalar_lea.vmem [#allocation4], %s721
        %v723 = vld [vmem:[%s722] sm:$0xff]
        %p724 = scmp.lt.s32.totalorder %s57, 0
        %s725 = ssub.s32 0, %s57
        %s726 = scalar_select %p724, %s725, %s57
        %s727 = sand.u32 %s726, 1
        %s728 = ssub.s32 0, %s727
        %s729 = scalar_select %p724, %s728, %s727
        %s730 = smul.u32 %s729, 8
        %s731 = scalar_lea.vmem [#allocation4], %s730
        %732 = vst [vmem:[%s731] sm:$0xff] %v710
        %v733 = vld [vmem:[%s597] sm:$0xff]
        %v734 = vld [vmem:[%s597 + $0x8] sm:$0xff]
        %v735 = vld [vmem:[%s597 + $0x10] sm:$0xff]
        %v736 = vld [vmem:[%s597 + $0x18] sm:$0xff]
        %v737 = vld [vmem:[%s597 + $0x20] sm:$0xff]
        %v738 = vld [vmem:[%s597 + $0x28] sm:$0xff]
        %v739 = vld [vmem:[%s597 + $0x30] sm:$0xff]
        %v740 = vld [vmem:[%s597 + $0x38] sm:$0xff]
        %v741 = vld [vmem:[%s597 + $0x40] sm:$0xff]
        %v742 = vld [vmem:[%s597 + $0x48] sm:$0xff]
        %v743 = vld [vmem:[%s597 + $0x50] sm:$0xff]
        %v744 = vld [vmem:[%s597 + $0x58] sm:$0xff]
        %v745 = vld [vmem:[%s597 + $0x60] sm:$0xff]
        %v746 = vld [vmem:[%s597 + $0x68] sm:$0xff]
        %v747 = vld [vmem:[%s597 + $0x70] sm:$0xff]
        %v748 = vld [vmem:[%s597 + $0x78] sm:$0xff]
        %v749 = vld [vmem:[%s597 + $0x80] sm:$0xff]
        %v750 = vld [vmem:[%s597 + $0x88] sm:$0xff]
        %v751 = vld [vmem:[%s597 + $0x90] sm:$0xff]
        %v752 = vld [vmem:[%s597 + $0x98] sm:$0xff]
        %v753 = vld [vmem:[%s597 + $0xa0] sm:$0xff]
        %v754 = vld [vmem:[%s597 + $0xa8] sm:$0xff]
        %v755 = vld [vmem:[%s597 + $0xb0] sm:$0xff]
        %v756 = vld [vmem:[%s597 + $0xb8] sm:$0xff]
        %v757 = vld [vmem:[%s597 + $0xc0] sm:$0xff]
        %v758 = vld [vmem:[%s597 + $0xc8] sm:$0xff]
        %v759 = vld [vmem:[%s597 + $0xd0] sm:$0xff]
        %v760 = vld [vmem:[%s597 + $0xd8] sm:$0xff]
        %v761 = vld [vmem:[%s597 + $0xe0] sm:$0xff]
        %v762 = vld [vmem:[%s597 + $0xe8] sm:$0xff]
        %v763 = vld [vmem:[%s597 + $0xf0] sm:$0xff]
        %v764 = vld [vmem:[%s597 + $0xf8] sm:$0xff]
        %v765 = vld [vmem:[%s597 + $0x100] sm:$0xff]
        %v766 = vld [vmem:[%s597 + $0x108] sm:$0xff]
        %v767 = vld [vmem:[%s597 + $0x110] sm:$0xff]
        %v768 = vld [vmem:[%s597 + $0x118] sm:$0xff]
        %v769 = vld [vmem:[%s597 + $0x120] sm:$0xff]
        %v770 = vld [vmem:[%s597 + $0x128] sm:$0xff]
        %v771 = vld [vmem:[%s597 + $0x130] sm:$0xff]
        %v772 = vld [vmem:[%s597 + $0x138] sm:$0xff]
        %v773 = vld [vmem:[%s597 + $0x140] sm:$0xff]
        %v774 = vld [vmem:[%s597 + $0x148] sm:$0xff]
        %v775 = vld [vmem:[%s597 + $0x150] sm:$0xff]
        %v776 = vld [vmem:[%s597 + $0x158] sm:$0xff]
        %v777 = vld [vmem:[%s597 + $0x160] sm:$0xff]
        %v778 = vld [vmem:[%s597 + $0x168] sm:$0xff]
        %v779 = vld [vmem:[%s597 + $0x170] sm:$0xff]
        %v780 = vld [vmem:[%s597 + $0x178] sm:$0xff]
        %v781 = vld [vmem:[%s597 + $0x180] sm:$0xff]
        %v782 = vld [vmem:[%s597 + $0x188] sm:$0xff]
        %v783 = vld [vmem:[%s597 + $0x190] sm:$0xff]
        %v784 = vld [vmem:[%s597 + $0x198] sm:$0xff]
        %v785 = vld [vmem:[%s597 + $0x1a0] sm:$0xff]
        %v786 = vld [vmem:[%s597 + $0x1a8] sm:$0xff]
        %v787 = vld [vmem:[%s597 + $0x1b0] sm:$0xff]
        %v788 = vld [vmem:[%s597 + $0x1b8] sm:$0xff]
        %v789 = vld [vmem:[%s597 + $0x1c0] sm:$0xff]
        %v790 = vld [vmem:[%s597 + $0x1c8] sm:$0xff]
        %v791 = vld [vmem:[%s597 + $0x1d0] sm:$0xff]
        %v792 = vld [vmem:[%s597 + $0x1d8] sm:$0xff]
        %v793 = vld [vmem:[%s597 + $0x1e0] sm:$0xff]
        %v794 = vld [vmem:[%s597 + $0x1e8] sm:$0xff]
        %v795 = vld [vmem:[%s597 + $0x1f0] sm:$0xff]
        %v796 = vld [vmem:[%s597 + $0x1f8] sm:$0xff]
        %v797 = vld [vmem:[%s597 + $0x200] sm:$0xff]
        %v798 = vld [vmem:[%s597 + $0x208] sm:$0xff]
        %v799 = vld [vmem:[%s597 + $0x210] sm:$0xff]
        %v800 = vld [vmem:[%s597 + $0x218] sm:$0xff]
        %v801 = vld [vmem:[%s597 + $0x220] sm:$0xff]
        %v802 = vld [vmem:[%s597 + $0x228] sm:$0xff]
        %v803 = vld [vmem:[%s597 + $0x230] sm:$0xff]
        %v804 = vld [vmem:[%s597 + $0x238] sm:$0xff]
        %v805 = vld [vmem:[%s597 + $0x240] sm:$0xff]
        %v806 = vld [vmem:[%s597 + $0x248] sm:$0xff]
        %v807 = vld [vmem:[%s597 + $0x250] sm:$0xff]
        %v808 = vld [vmem:[%s597 + $0x258] sm:$0xff]
        %v809 = vld [vmem:[%s597 + $0x260] sm:$0xff]
        %v810 = vld [vmem:[%s597 + $0x268] sm:$0xff]
        %v811 = vld [vmem:[%s597 + $0x270] sm:$0xff]
        %v812 = vld [vmem:[%s597 + $0x278] sm:$0xff]
        %v813 = vld [vmem:[%s597 + $0x280] sm:$0xff]
        %v814 = vld [vmem:[%s597 + $0x288] sm:$0xff]
        %v815 = vld [vmem:[%s597 + $0x290] sm:$0xff]
        %v816 = vld [vmem:[%s597 + $0x298] sm:$0xff]
        %v817 = vld [vmem:[%s597 + $0x2a0] sm:$0xff]
        %v818 = vld [vmem:[%s597 + $0x2a8] sm:$0xff]
        %v819 = vld [vmem:[%s597 + $0x2b0] sm:$0xff]
        %v820 = vld [vmem:[%s597 + $0x2b8] sm:$0xff]
        %v821 = vld [vmem:[%s597 + $0x2c0] sm:$0xff]
        %v822 = vld [vmem:[%s597 + $0x2c8] sm:$0xff]
        %v823 = vld [vmem:[%s597 + $0x2d0] sm:$0xff]
        %v824 = vld [vmem:[%s597 + $0x2d8] sm:$0xff]
        %v825 = vld [vmem:[%s597 + $0x2e0] sm:$0xff]
        %v826 = vld [vmem:[%s597 + $0x2e8] sm:$0xff]
        %v827 = vld [vmem:[%s597 + $0x2f0] sm:$0xff]
        %v828 = vld [vmem:[%s597 + $0x2f8] sm:$0xff]
        %v829 = vld [vmem:[%s597 + $0x300] sm:$0xff]
        %v830 = vld [vmem:[%s597 + $0x308] sm:$0xff]
        %v831 = vld [vmem:[%s597 + $0x310] sm:$0xff]
        %v832 = vld [vmem:[%s597 + $0x318] sm:$0xff]
        %v833 = vld [vmem:[%s597 + $0x320] sm:$0xff]
        %v834 = vld [vmem:[%s597 + $0x328] sm:$0xff]
        %v835 = vld [vmem:[%s597 + $0x330] sm:$0xff]
        %v836 = vld [vmem:[%s597 + $0x338] sm:$0xff]
        %v837 = vld [vmem:[%s597 + $0x340] sm:$0xff]
        %v838 = vld [vmem:[%s597 + $0x348] sm:$0xff]
        %v839 = vld [vmem:[%s597 + $0x350] sm:$0xff]
        %v840 = vld [vmem:[%s597 + $0x358] sm:$0xff]
        %v841 = vld [vmem:[%s597 + $0x360] sm:$0xff]
        %v842 = vld [vmem:[%s597 + $0x368] sm:$0xff]
        %v843 = vld [vmem:[%s597 + $0x370] sm:$0xff]
        %v844 = vld [vmem:[%s597 + $0x378] sm:$0xff]
        %v845 = vld [vmem:[%s597 + $0x380] sm:$0xff]
        %v846 = vld [vmem:[%s597 + $0x388] sm:$0xff]
        %v847 = vld [vmem:[%s597 + $0x390] sm:$0xff]
        %v848 = vld [vmem:[%s597 + $0x398] sm:$0xff]
        %v849 = vld [vmem:[%s597 + $0x3a0] sm:$0xff]
        %v850 = vld [vmem:[%s597 + $0x3a8] sm:$0xff]
        %v851 = vld [vmem:[%s597 + $0x3b0] sm:$0xff]
        %v852 = vld [vmem:[%s597 + $0x3b8] sm:$0xff]
        %v853 = vld [vmem:[%s597 + $0x3c0] sm:$0xff]
        %v854 = vld [vmem:[%s597 + $0x3c8] sm:$0xff]
        %v855 = vld [vmem:[%s597 + $0x3d0] sm:$0xff]
        %v856 = vld [vmem:[%s597 + $0x3d8] sm:$0xff]
        %v857 = vld [vmem:[%s597 + $0x3e0] sm:$0xff]
        %v858 = vld [vmem:[%s597 + $0x3e8] sm:$0xff]
        %v859 = vld [vmem:[%s597 + $0x3f0] sm:$0xff]
        %v860 = vld [vmem:[%s597 + $0x3f8] sm:$0xff]
        %v861 = vld [vmem:[%s607] sm:$0xf]
        %v863 = vperm.slane %v861, 0
        %v864 = vperm.slane %v861, 1
        %v865 = vperm.slane %v861, 2
        %v866 = vperm.slane %v861, 3
        %871 = vmatpush.msra.mxu0 %v793
        %872 = vmatpush.msra.mxu0 %v789
        %873 = vmatpush.msra.mxu0 %v785
        %874 = vmatpush.msra.mxu0 %v781
        %875 = vmatpush.msra.mxu0 %v777
        %876 = vmatpush.msra.mxu0 %v773
        %877 = vmatpush.msra.mxu0 %v769
        %878 = vmatpush.msra.mxu0 %v765
        %879 = vmatpush.msra.mxu0 %v761
        %880 = vmatpush.msra.mxu0 %v757
        %881 = vmatpush.msra.mxu0 %v753
        %882 = vmatpush.msra.mxu0 %v749
        %883 = vmatpush.msra.mxu0 %v745
        %884 = vmatpush.msra.mxu0 %v741
        %885 = vmatpush.msra.mxu0 %v737
        %886 = vmatpush.msra.mxu0 %v733
        %887 = vmatmul.f32.gmra.mxu0 %v712
        %v888 = vpop.f32.mrf.mxu0
        %v889 = vadd.f32 %v863, %v888
        %890 = vdwg.mxu0
        %891 = vmatpush.msra.mxu0 %v857
        %892 = vmatpush.msra.mxu0 %v853
        %893 = vmatpush.msra.mxu0 %v849
        %894 = vmatpush.msra.mxu0 %v845
        %895 = vmatpush.msra.mxu0 %v841
        %896 = vmatpush.msra.mxu0 %v837
        %897 = vmatpush.msra.mxu0 %v833
        %898 = vmatpush.msra.mxu0 %v829
        %899 = vmatpush.msra.mxu0 %v825
        %900 = vmatpush.msra.mxu0 %v821
        %901 = vmatpush.msra.mxu0 %v817
        %902 = vmatpush.msra.mxu0 %v813
        %903 = vmatpush.msra.mxu0 %v809
        %904 = vmatpush.msra.mxu0 %v805
        %905 = vmatpush.msra.mxu0 %v801
        %906 = vmatpush.msra.mxu0 %v797
        %907 = vmatmul.f32.gmra.mxu0 %v710
        %v908 = vpop.f32.mrf.mxu0
        %v909 = vadd.f32 %v889, %v908
        %910 = vdwg.mxu0
        %911 = vmatpush.msra.mxu0 %v794
        %912 = vmatpush.msra.mxu0 %v790
        %913 = vmatpush.msra.mxu0 %v786
        %914 = vmatpush.msra.mxu0 %v782
        %915 = vmatpush.msra.mxu0 %v778
        %916 = vmatpush.msra.mxu0 %v774
        %917 = vmatpush.msra.mxu0 %v770
        %918 = vmatpush.msra.mxu0 %v766
        %919 = vmatpush.msra.mxu0 %v762
        %920 = vmatpush.msra.mxu0 %v758
        %921 = vmatpush.msra.mxu0 %v754
        %922 = vmatpush.msra.mxu0 %v750
        %923 = vmatpush.msra.mxu0 %v746
        %924 = vmatpush.msra.mxu0 %v742
        %925 = vmatpush.msra.mxu0 %v738
        %926 = vmatpush.msra.mxu0 %v734
        %927 = vmatmul.f32.gmra.mxu0 %v712
        %v928 = vpop.f32.mrf.mxu0
        %v929 = vadd.f32 %v864, %v928
        %930 = vdwg.mxu0
        %931 = vmatpush.msra.mxu0 %v858
        %932 = vmatpush.msra.mxu0 %v854
        %933 = vmatpush.msra.mxu0 %v850
        %934 = vmatpush.msra.mxu0 %v846
        %935 = vmatpush.msra.mxu0 %v842
        %936 = vmatpush.msra.mxu0 %v838
        %937 = vmatpush.msra.mxu0 %v834
        %938 = vmatpush.msra.mxu0 %v830
        %939 = vmatpush.msra.mxu0 %v826
        %940 = vmatpush.msra.mxu0 %v822
        %941 = vmatpush.msra.mxu0 %v818
        %942 = vmatpush.msra.mxu0 %v814
        %943 = vmatpush.msra.mxu0 %v810
        %944 = vmatpush.msra.mxu0 %v806
        %945 = vmatpush.msra.mxu0 %v802
        %946 = vmatpush.msra.mxu0 %v798
        %947 = vmatmul.f32.gmra.mxu0 %v710
        %v948 = vpop.f32.mrf.mxu0
        %v949 = vadd.f32 %v929, %v948
        %950 = vdwg.mxu0
        %951 = vmatpush.msra.mxu0 %v795
        %952 = vmatpush.msra.mxu0 %v791
        %953 = vmatpush.msra.mxu0 %v787
        %954 = vmatpush.msra.mxu0 %v783
        %955 = vmatpush.msra.mxu0 %v779
        %956 = vmatpush.msra.mxu0 %v775
        %957 = vmatpush.msra.mxu0 %v771
        %958 = vmatpush.msra.mxu0 %v767
        %959 = vmatpush.msra.mxu0 %v763
        %960 = vmatpush.msra.mxu0 %v759
        %961 = vmatpush.msra.mxu0 %v755
        %962 = vmatpush.msra.mxu0 %v751
        %963 = vmatpush.msra.mxu0 %v747
        %964 = vmatpush.msra.mxu0 %v743
        %965 = vmatpush.msra.mxu0 %v739
        %966 = vmatpush.msra.mxu0 %v735
        %967 = vmatmul.f32.gmra.mxu0 %v712
        %v968 = vpop.f32.mrf.mxu0
        %v969 = vadd.f32 %v865, %v968
        %970 = vdwg.mxu0
        %971 = vmatpush.msra.mxu0 %v859
        %972 = vmatpush.msra.mxu0 %v855
        %973 = vmatpush.msra.mxu0 %v851
        %974 = vmatpush.msra.mxu0 %v847
        %975 = vmatpush.msra.mxu0 %v843
        %976 = vmatpush.msra.mxu0 %v839
        %977 = vmatpush.msra.mxu0 %v835
        %978 = vmatpush.msra.mxu0 %v831
        %979 = vmatpush.msra.mxu0 %v827
        %980 = vmatpush.msra.mxu0 %v823
        %981 = vmatpush.msra.mxu0 %v819
        %982 = vmatpush.msra.mxu0 %v815
        %983 = vmatpush.msra.mxu0 %v811
        %984 = vmatpush.msra.mxu0 %v807
        %985 = vmatpush.msra.mxu0 %v803
        %986 = vmatpush.msra.mxu0 %v799
        %987 = vmatmul.f32.gmra.mxu0 %v710
        %v988 = vpop.f32.mrf.mxu0
        %v989 = vadd.f32 %v969, %v988
        %990 = vdwg.mxu0
        %991 = vmatpush.msra.mxu0 %v796
        %992 = vmatpush.msra.mxu0 %v792
        %993 = vmatpush.msra.mxu0 %v788
        %994 = vmatpush.msra.mxu0 %v784
        %995 = vmatpush.msra.mxu0 %v780
        %996 = vmatpush.msra.mxu0 %v776
        %997 = vmatpush.msra.mxu0 %v772
        %998 = vmatpush.msra.mxu0 %v768
        %999 = vmatpush.msra.mxu0 %v764
        %1000 = vmatpush.msra.mxu0 %v760
        %1001 = vmatpush.msra.mxu0 %v756
        %1002 = vmatpush.msra.mxu0 %v752
        %1003 = vmatpush.msra.mxu0 %v748
        %1004 = vmatpush.msra.mxu0 %v744
        %1005 = vmatpush.msra.mxu0 %v740
        %1006 = vmatpush.msra.mxu0 %v736
        %1007 = vmatmul.f32.gmra.mxu0 %v712
        %v1008 = vpop.f32.mrf.mxu0
        %v1009 = vadd.f32 %v866, %v1008
        %1010 = vdwg.mxu0
        %1011 = vmatpush.msra.mxu0 %v860
        %1012 = vmatpush.msra.mxu0 %v856
        %1013 = vmatpush.msra.mxu0 %v852
        %1014 = vmatpush.msra.mxu0 %v848
        %1015 = vmatpush.msra.mxu0 %v844
        %1016 = vmatpush.msra.mxu0 %v840
        %1017 = vmatpush.msra.mxu0 %v836
        %1018 = vmatpush.msra.mxu0 %v832
        %1019 = vmatpush.msra.mxu0 %v828
        %1020 = vmatpush.msra.mxu0 %v824
        %1021 = vmatpush.msra.mxu0 %v820
        %1022 = vmatpush.msra.mxu0 %v816
        %1023 = vmatpush.msra.mxu0 %v812
        %1024 = vmatpush.msra.mxu0 %v808
        %1025 = vmatpush.msra.mxu0 %v804
        %1026 = vmatpush.msra.mxu0 %v800
        %1027 = vmatmul.f32.gmra.mxu0 %v710
        %v1028 = vpop.f32.mrf.mxu0
        %v1029 = vadd.f32 %v1009, %v1028
        %1030 = vdwg.mxu0
        %v1031 = vxor.u32 %v909, 2147483648
        %v1032 = vmul.f32 %v1031, 1.442695
        %v1033 = vpow.pop %v1032
        %v1034 = vadd.f32 %v1033, 1.0
        %v1035 = vrcp.pop %v1034
        %v1036 = vmul.f32 %v1034, %v1035
        %v1037 = vsub.f32 1.0, %v1036
        %v1038 = vmul.f32 %v1035, %v1037
        %v1039 = vadd.f32 %v1035, %v1038
        %vm1040 = vweird.f32 %v1034
        %vm1041 = vweird.f32 %v1035
        %vm1042 = vmor %vm1040, %vm1041
        %v1043 = vsel %vm1042, %v1035, %v1039
        %v1044 = vand.u32 2147483647, %v1034
        %vm1045 = vcmp.eq.f32.partialorder %v1044, 8.507059e+37
        %v1046 = vand.u32 %v1034, 2147483648
        %v1047 = vor.u32 1.1754944e-38, %v1046
        %v1048 = vsel %vm1045, %v1047, %v1043
        %v1049 = vmul.f32 1.0, %v1048
        %v1050 = vxor.u32 %v949, 2147483648
        %v1051 = vmul.f32 %v1050, 1.442695
        %v1052 = vpow.pop %v1051
        %v1053 = vadd.f32 %v1052, 1.0
        %v1054 = vrcp.pop %v1053
        %v1055 = vmul.f32 %v1053, %v1054
        %v1056 = vsub.f32 1.0, %v1055
        %v1057 = vmul.f32 %v1054, %v1056
        %v1058 = vadd.f32 %v1054, %v1057
        %vm1059 = vweird.f32 %v1053
        %vm1060 = vweird.f32 %v1054
        %vm1061 = vmor %vm1059, %vm1060
        %v1062 = vsel %vm1061, %v1054, %v1058
        %v1063 = vand.u32 2147483647, %v1053
        %vm1064 = vcmp.eq.f32.partialorder %v1063, 8.507059e+37
        %v1065 = vand.u32 %v1053, 2147483648
        %v1066 = vor.u32 1.1754944e-38, %v1065
        %v1067 = vsel %vm1064, %v1066, %v1062
        %v1068 = vmul.f32 1.0, %v1067
        %v1069 = vtanh.pop %v989
        %v1070 = vxor.u32 %v1029, 2147483648
        %v1071 = vmul.f32 %v1070, 1.442695
        %v1072 = vpow.pop %v1071
        %v1073 = vadd.f32 %v1072, 1.0
        %v1074 = vrcp.pop %v1073
        %v1075 = vmul.f32 %v1073, %v1074
        %v1076 = vsub.f32 1.0, %v1075
        %v1077 = vmul.f32 %v1074, %v1076
        %v1078 = vadd.f32 %v1074, %v1077
        %vm1079 = vweird.f32 %v1073
        %vm1080 = vweird.f32 %v1074
        %vm1081 = vmor %vm1079, %vm1080
        %v1082 = vsel %vm1081, %v1074, %v1078
        %v1083 = vand.u32 2147483647, %v1073
        %vm1084 = vcmp.eq.f32.partialorder %v1083, 8.507059e+37
        %v1085 = vand.u32 %v1073, 2147483648
        %v1086 = vor.u32 1.1754944e-38, %v1085
        %v1087 = vsel %vm1084, %v1086, %v1082
        %v1088 = vmul.f32 1.0, %v1087
        %v1089 = vmul.f32 %v1068, %v711
        %v1090 = vmul.f32 %v1049, %v1069
        %v1091 = vadd.f32 %v1089, %v1090
        %v1092 = vtanh.pop %v1091
        %v1093 = vmul.f32 %v1088, %v1092
        %v1094 = vld [vmem:[%s617] sm:$0xff]
        %v1095 = vld [vmem:[%s617 + $0x8] sm:$0xff]
        %v1096 = vld [vmem:[%s617 + $0x10] sm:$0xff]
        %v1097 = vld [vmem:[%s617 + $0x18] sm:$0xff]
        %v1098 = vld [vmem:[%s617 + $0x20] sm:$0xff]
        %v1099 = vld [vmem:[%s617 + $0x28] sm:$0xff]
        %v1100 = vld [vmem:[%s617 + $0x30] sm:$0xff]
        %v1101 = vld [vmem:[%s617 + $0x38] sm:$0xff]
        %v1102 = vld [vmem:[%s617 + $0x40] sm:$0xff]
        %v1103 = vld [vmem:[%s617 + $0x48] sm:$0xff]
        %v1104 = vld [vmem:[%s617 + $0x50] sm:$0xff]
        %v1105 = vld [vmem:[%s617 + $0x58] sm:$0xff]
        %v1106 = vld [vmem:[%s617 + $0x60] sm:$0xff]
        %v1107 = vld [vmem:[%s617 + $0x68] sm:$0xff]
        %v1108 = vld [vmem:[%s617 + $0x70] sm:$0xff]
        %v1109 = vld [vmem:[%s617 + $0x78] sm:$0xff]
        %v1110 = vld [vmem:[%s698] sm:$0x1]
        %v1112 = vperm.slane %v1110, 0
        %1114 = vmatpush.msra.mxu0 %v1109
        %1115 = vmatpush.msra.mxu0 %v1108
        %1116 = vmatpush.msra.mxu0 %v1107
        %1117 = vmatpush.msra.mxu0 %v1106
        %1118 = vmatpush.msra.mxu0 %v1105
        %1119 = vmatpush.msra.mxu0 %v1104
        %1120 = vmatpush.msra.mxu0 %v1103
        %1121 = vmatpush.msra.mxu0 %v1102
        %1122 = vmatpush.msra.mxu0 %v1101
        %1123 = vmatpush.msra.mxu0 %v1100
        %1124 = vmatpush.msra.mxu0 %v1099
        %1125 = vmatpush.msra.mxu0 %v1098
        %1126 = vmatpush.msra.mxu0 %v1097
        %1127 = vmatpush.msra.mxu0 %v1096
        %1128 = vmatpush.msra.mxu0 %v1095
        %1129 = vmatpush.msra.mxu0 %v1094
        %1130 = vmatmul.f32.gmra.mxu0 %v723
        %v1131 = vpop.f32.mrf.mxu0
        %v1132 = vadd.f32 %v1112, %v1131
        %1133 = vdwg.mxu0
        %v1134 = vxor.u32 %v1132, 2147483648
        %v1135 = vmul.f32 %v1134, 1.442695
        %v1136 = vpow.pop %v1135
        %v1137 = vadd.f32 %v1136, 1.0
        %v1138 = vrcp.pop %v1137
        %v1139 = vmul.f32 %v1137, %v1138
        %v1140 = vsub.f32 1.0, %v1139
        %v1141 = vmul.f32 %v1138, %v1140
        %v1142 = vadd.f32 %v1138, %v1141
        %vm1143 = vweird.f32 %v1137
        %vm1144 = vweird.f32 %v1138
        %vm1145 = vmor %vm1143, %vm1144
        %v1146 = vsel %vm1145, %v1138, %v1142
        %v1147 = vand.u32 2147483647, %v1137
        %vm1148 = vcmp.eq.f32.partialorder %v1147, 8.507059e+37
        %v1149 = vand.u32 %v1137, 2147483648
        %v1150 = vor.u32 1.1754944e-38, %v1149
        %v1151 = vsel %vm1148, %v1150, %v1146
        %v1152 = vmul.f32 1.0, %v1151
        %v1153 = vld [vmem:[%s578] sm:$0x1]
        %v1155 = vperm.slane %v1153, 0
        %v1157 = vmul.f32 %v1093, %v1155
        %v1158 = vld [vmem:[%s587] sm:$0x1]
        %v1160 = vperm.slane %v1158, 0
        %v1162 = vmul.f32 %v1152, %v1160
        %v1163 = vadd.f32 %v1157, %v1162
        %1164 = vst [vmem:[#allocation2] sm:$0xff] %v1163
        %1165 = vst [vmem:[#allocation3] sm:$0xff] %v1091
        %1166 = vst [vmem:[%s688] sm:$0xff] %v1163
        %1167 = vst [vmem:[%s695] sm:$0xff] %v1091
        %s1168 = sand.u32 %s314, 1
        %s1169 = scalar_lea.sflag [#allocation9], %s1168
        %s1170 = sand.u32 %s314, 1
        %s1171 = smul.addr %s1170, 8
        %s1172 = scalar_lea.vmem [#allocation21], %s1171
        %s1173 = sand.u32 %s340, 1
        %s1174 = scalar_lea.sflag [#allocation23], %s1173
        %s1175 = sand.u32 %s340, 1
        %s1176 = smul.addr %s1175, 8
        %s1177 = scalar_lea.vmem [#allocation22], %s1176
        // Predicated region
        $region93: #{tpu_custom_call.1} parent=55 // pred_check
          %p1178 = pneg %p324
        $region94: #{tpu_custom_call.1} parent=55 // pred_check_branch
          %1180 = sbr.rel (%p1178) target = $region96
        $region95: #{tpu_custom_call.1} parent=55 // pred_region
          %1182 = vsyncadd %s1169, 0
          %s1183 = smul.addr %s56, 8
          %s1184 = sadd.s32 %s57, %s1183
          %s1185 = smul.addr %s1184, 8
          %s1186 = scalar_lea.hbm %s10, %s1185
          %s1188 = sshll.u32 %s1172, 4
          %s1189 = int_to_ptr.vmem [resolvable:$true] %s1188
          %s1190 = sshll.u32 %s1186, 4
          %s1191 = int_to_ptr.hbm [resolvable:$true] %s1190
          %1193 = dma.vmem_to_hbm [thread:$0]  %s1189, 128, %s1191, %s1169
        $region96: #{tpu_custom_call.1} parent=55 // pred_fallthru
          _
        // Predicated region
        $region97: #{tpu_custom_call.1} parent=55 // pred_check
          %p1194 = pneg %p350
        $region98: #{tpu_custom_call.1} parent=55 // pred_check_branch
          %1196 = sbr.rel (%p1194) target = $region100
        $region99: #{tpu_custom_call.1} parent=55 // pred_region
          %1198 = vsyncadd %s1174, 0
          %s1199 = smul.addr %s56, 8
          %s1200 = scalar_lea.hbm %s11, %s1199
          %s1202 = sshll.u32 %s1177, 4
          %s1203 = int_to_ptr.vmem [resolvable:$true] %s1202
          %s1204 = sshll.u32 %s1200, 4
          %s1205 = int_to_ptr.hbm [resolvable:$true] %s1204
          %1207 = dma.vmem_to_hbm [thread:$0]  %s1203, 128, %s1205, %s1174
        $region100: #{tpu_custom_call.1} parent=55 // pred_fallthru
          _
      $region56: #{tpu_custom_call.1} parent=5 // pred_fallthru
        _
      %p1208 = scmp.le.s32.totalorder 2, %s47
      // Predicated region
      $region101: #{tpu_custom_call.1} parent=5 // pred_check
        %p1209 = pneg %p1208
      $region102: #{tpu_custom_call.1} parent=5 // pred_check_branch
        %1211 = sbr.rel (%p1209) target = $region104
      $region103: #{tpu_custom_call.1} parent=5 // pred_region
        %s1212 = ssub.s32 %s47, 2
        // Predicated region
        $region105: #{tpu_custom_call.1} parent=103 // pred_check
          %p1213 = pneg %p330
        $region106: #{tpu_custom_call.1} parent=103 // pred_check_branch
          %1215 = sbr.rel (%p1213) target = $region108
        $region107: #{tpu_custom_call.1} parent=103 // pred_region
          %s1216 = sand.u32 %s315, 1
          %s1217 = scalar_lea.sflag [#allocation9], %s1216
          %s1218 = sand.u32 %s315, 1
          %s1219 = smul.addr %s1218, 8
          %s1220 = scalar_lea.vmem [#allocation21], %s1219
          %1222 = dma.done %s1217, 128
        $region108: #{tpu_custom_call.1} parent=103 // pred_fallthru
          _
        // Predicated region
        $region109: #{tpu_custom_call.1} parent=103 // pred_check
          %p1223 = pneg %p356
        $region110: #{tpu_custom_call.1} parent=103 // pred_check_branch
          %1225 = sbr.rel (%p1223) target = $region112
        $region111: #{tpu_custom_call.1} parent=103 // pred_region
          %s1226 = sand.u32 %s341, 1
          %s1227 = scalar_lea.sflag [#allocation23], %s1226
          %s1228 = sand.u32 %s341, 1
          %s1229 = smul.addr %s1228, 8
          %s1230 = scalar_lea.vmem [#allocation22], %s1229
          %1232 = dma.done %s1227, 128
        $region112: #{tpu_custom_call.1} parent=103 // pred_fallthru
          _
      $region104: #{tpu_custom_call.1} parent=5 // pred_fallthru
        _
    $region6: #{tpu_custom_call.1} parent=1 // loop_footer
      %s51 = sadd.s32 1, %s47
    $region7: #{tpu_custom_call.1} parent=1 // loop_footer_branch
      %46 = sbr.rel target = $region3
    $region8: #{tpu_custom_call.1} parent=1 // loop_exit
      _
    %1233 = vsyncpa [#allocation8], 1
    %s1234 = scalar_lea.sflag [#allocation8], 1
    %1235 = vsyncpa %s1234, 1
    %1236 = vsyncpa [#allocation11], 1
    %s1237 = scalar_lea.sflag [#allocation11], 1
    %1238 = vsyncpa %s1237, 1
    %1239 = vsyncpa [#allocation14], 1
    %s1240 = scalar_lea.sflag [#allocation14], 1
    %1241 = vsyncpa %s1240, 1
    %1242 = vsyncpa [#allocation17], 1
    %s1243 = scalar_lea.sflag [#allocation17], 1
    %1244 = vsyncpa %s1243, 1
    %1245 = vsyncpa [#allocation20], 1
    %s1246 = scalar_lea.sflag [#allocation20], 1
    %1247 = vsyncpa %s1246, 1
    %1248 = vsyncpa [#allocation9], 1
    %s1249 = scalar_lea.sflag [#allocation9], 1
    %1250 = vsyncpa %s1249, 1
    %1251 = vsyncpa [#allocation23], 1
    %s1252 = scalar_lea.sflag [#allocation23], 1
    %1253 = vsyncpa %s1252, 1

</llo_original>
